<compile_context>
chip_gen: v5e
topology: v5e:2x2
jax: 0.10.0
libtpu: 0.0.40
codegen_flags: <defaults>
</compile_context>

<pallas_src>
import math
import numpy as np

import jax
import jax.numpy as jnp
from jax.experimental import pallas as pl
from jax.experimental.pallas import tpu as pltpu

LN_EPS = 1e-12
_INV_SQRT2 = 1.0 / math.sqrt(2.0)


# --------------------------------------------------------------------------
# Kernel
# --------------------------------------------------------------------------
def lm_head_kernel(x_ref, wd_ref, lnp_ref, wproj_ref, wdec_ref, bias_ref,
                   out_ref, p_ref):
    """One (m_tile, v_tile) grid step.

    Grid: i = token tile ("parallel"), j = vocab tile ("arbitrary", inner &
    sequential per core).  The transform chain runs once per M-tile (at j==0)
    and is cached in the bf16 VMEM scratch p_ref; every V-tile then runs only
    the [tm, Vi] @ [Vi, tn] decoder matmul with a fused bias-add epilogue.
    NOTE: this caching relies on j being the inner, sequentially executed
    ("arbitrary") grid axis — do not reorder the grid or mark j "parallel".
    """

    @pl.when(pl.program_id(1) == 0)
    def _compute_transform():
        lnp = lnp_ref[...]                       # (8, H) f32: rows 0/1/2 = bd, gamma, beta

        # 1) transform.dense : bf16 x bf16 -> f32 accumulate on the MXU
        h = jnp.dot(x_ref[...], wd_ref[...], preferred_element_type=jnp.float32)
        h = h + lnp[0:1, :]

        # 2) exact erf GELU (f32, EUP)
        h = 0.5 * h * (1.0 + jax.lax.erf(h * _INV_SQRT2))

        # 3) LayerNorm over the feature axis — two-pass centered variance
        mean = jnp.mean(h, axis=-1, keepdims=True)
        c = h - mean
        var = jnp.mean(c * c, axis=-1, keepdims=True)
        h = c * jax.lax.rsqrt(var + LN_EPS)
        h = h * lnp[1:2, :] + lnp[2:3, :]

        # 4) word_embeddings_projection: [tm, H] @ [H, Vi]; cache bf16 result
        p = jnp.dot(h.astype(jnp.bfloat16), wproj_ref[...],
                    preferred_element_type=jnp.float32)
        p_ref[...] = p.astype(jnp.bfloat16)

    # 5) decoder, tiled over V: [tm, Vi] @ [Vi, tn] (bf16 MXU, f32 accumulate);
    #    tied-bias add + dtype cast fused into the single lane-dense store.
    logits = jnp.dot(p_ref[...], wdec_ref[...],
                     preferred_element_type=jnp.float32)
    out_ref[...] = (logits + bias_ref[...]).astype(out_ref.dtype)


# --------------------------------------------------------------------------
# Wrapper helpers
# --------------------------------------------------------------------------
def _round_up(x, m):
    return ((x + m - 1) // m) * m


def _vmem_limit_bytes():
    """Generation-aware scoped-VMEM limit.

    ~75% of physical capacity, capped at 100 MiB: ~48 MiB on v7x (64 MiB
    physical, leaves headroom for Mosaic internal scratch), ~96 MiB on
    v5e/v6e (128 MiB physical).
    """
    cap = 64 * 1024 * 1024
    try:
        cap = int(pltpu.get_tpu_info().vmem_capacity_bytes)
    except Exception:
        pass
    return int(max(16 * 1024 * 1024, min(100 * 1024 * 1024, int(cap * 0.75))))


def _choose_tm(H, Vi, tn, budget_bytes):
    """Largest token tile whose double-buffered working set fits the budget."""
    for tm in (1024, 512, 256, 128, 64, 32, 16):
        need = (2 * tm * H * 2        # x tiles (bf16, double-buffered)
                + H * H * 2           # dense weight (single-buffered)
                + 8 * H * 4           # packed bd / gamma / beta
                + H * Vi * 2          # projection weight
                + 2 * Vi * tn * 2     # decoder-weight tiles (double-buffered)
                + 2 * 8 * tn * 4      # decoder-bias tiles
                + 2 * tm * tn * 4     # output tiles (f32, double-buffered)
                + tm * Vi * 2         # cached projection scratch (bf16)
                + 3 * tm * H * 4)     # f32 transform intermediates headroom
        if need <= budget_bytes:
            return tm
    return 16


def _build_in_specs(tm, tn, H, Vi, single_buffer_consts):
    const_kwargs = {}
    if single_buffer_consts:
        # Grid-constant weights: the second pipeline buffer is pure VMEM waste.
        const_kwargs = dict(pipeline_mode=pl.Buffered(1))

    def const(shape):
        return pl.BlockSpec(shape, lambda i, j: (0, 0), **const_kwargs)

    return [
        pl.BlockSpec((tm, H), lambda i, j: (i, 0)),    # x (bf16, per M-tile)
        const((H, H)),                                 # dense W  [in, out] bf16
        const((8, H)),                                 # packed bd/gamma/beta f32
        const((H, Vi)),                                # proj W   [H, Vi] bf16
        pl.BlockSpec((Vi, tn), lambda i, j: (0, j)),   # dec W^T  (per V-tile) bf16
        pl.BlockSpec((1, tn), lambda i, j: (0, j)),    # tied bias (per V-tile) f32
    ]


# --------------------------------------------------------------------------
# Public entry point
# --------------------------------------------------------------------------
def decomp_bert_lm_prediction_head(x, params, out_dtype=None):
    """x: [B, S, H] float32 -> logits [B, S, V].

    Set out_dtype=jnp.bfloat16 to halve the M x V HBM store stream if the
    downstream consumer (softmax / loss) accepts bf16 logits.
    """
    B, S, H = x.shape
    M = B * S
    Vi = params["wproj"].shape[1]
    V = params["wdec"].shape[1]
    out_dtype = out_dtype or x.dtype

    # ---- tile selection (lane-dense vocab tiles, VMEM-aware token tiles) ----
    if V >= 4096:
        tn = 1024                      # e.g. BERT V=30522 -> Vp=30720
    elif V >= 512:
        tn = 512
    else:
        tn = _round_up(V, 128)
    Vp = _round_up(V, tn)

    vmem_limit = _vmem_limit_bytes()
    tm = _choose_tm(H, Vi, tn, int(vmem_limit * 0.8))
    tm = min(tm, _round_up(M, 16))
    # Keep >= 2 M-tiles when possible: M is the "parallel" axis and v7x has
    # two TensorCores per chip.
    if tm >= M and M > 16:
        tm = max(16, _round_up((M + 1) // 2, 16))
    Mp = _round_up(M, tm)

    grid = (Mp // tm, Vp // tn)

    # ---- operand preparation (pad + bf16 casts, done once wrapper-side) ----
    x2 = x.reshape(M, H)
    if Mp != M:
        x2 = jnp.pad(x2, ((0, Mp - M), (0, 0)))
    x2 = x2.astype(jnp.bfloat16)

    wd = params["wd"].astype(jnp.bfloat16)          # [H, H]  (= dense.weight.T)
    wproj = params["wproj"].astype(jnp.bfloat16)    # [H, Vi]
    wdec = params["wdec"].astype(jnp.bfloat16)      # [Vi, V] (= decoder.weight.T)
    bias = params["bias"].astype(jnp.float32)       # [1, V]  tied decoder bias
    if Vp != V:
        wdec = jnp.pad(wdec, ((0, 0), (0, Vp - V)))
        bias = jnp.pad(bias, ((0, 0), (0, Vp - V)))

    # Pack dense-bias / LN gamma / LN beta into one (8, H) f32 operand.
    lnp = jnp.zeros((8, H), jnp.float32)
    lnp = lnp.at[0].set(params["bd"].reshape(H).astype(jnp.float32))
    lnp = lnp.at[1].set(params["gamma"].reshape(H).astype(jnp.float32))
    lnp = lnp.at[2].set(params["beta"].reshape(H).astype(jnp.float32))

    cost = pl.CostEstimate(
        flops=2 * Mp * (H * H + H * Vi + Vi * Vp),
        transcendentals=Mp * H,  # erf
        bytes_accessed=(2 * (Mp * H + H * H + H * Vi + Vi * Vp)   # bf16 streams
                        + 4 * (8 * H + Vp + Mp * Vp)),            # f32 params + logits
    )

    def _run(single_buffer_consts):
        return pl.pallas_call(
            lm_head_kernel,
            grid=grid,
            out_shape=jax.ShapeDtypeStruct((Mp, Vp), out_dtype),
            in_specs=_build_in_specs(tm, tn, H, Vi, single_buffer_consts),
            out_specs=pl.BlockSpec((tm, tn), lambda i, j: (i, j)),
            scratch_shapes=[pltpu.VMEM((tm, Vi), jnp.bfloat16)],
            compiler_params=pltpu.CompilerParams(
                dimension_semantics=("parallel", "arbitrary"),
                vmem_limit_bytes=vmem_limit),
            cost_estimate=cost,
        )(x2, wd, lnp, wproj, wdec, bias)

    try:
        out = _run(single_buffer_consts=True)
        jax.block_until_ready(out)
    except Exception:
        # Older jax without BlockSpec(pipeline_mode=...): fall back to default
        # double-buffered constants (costs a little extra VMEM only).
        out = _run(single_buffer_consts=False)

    return out[:M, :V].reshape(B, S, V)


# --------------------------------------------------------------------------
# Pure-JAX reference of the PyTorch forward (f32 throughout)
# --------------------------------------------------------------------------
def reference(x, params):
    h = jnp.einsum("bsh,hk->bsk", x, params["wd"]) + params["bd"][0]
    h = 0.5 * h * (1.0 + jax.lax.erf(h * _INV_SQRT2))
    mean = jnp.mean(h, -1, keepdims=True)
    var = jnp.mean(jnp.square(h - mean), -1, keepdims=True)
    h = (h - mean) * jax.lax.rsqrt(var + LN_EPS)
    h = h * params["gamma"][0] + params["beta"][0]
    p = jnp.einsum("bsh,hv->bsv", h, params["wproj"])
    return jnp.einsum("bsv,vw->bsw", p, params["wdec"]) + params["bias"][0]


if __name__ == "__main__":
    # Small config: hidden_size=32, vocab_intermediate_size=64, vocab_size=1000.
    # M=18 (pads to 32, two M-tiles) and V=1000 (pads to 1024, two V-tiles)
    # exercise the padding path, the multi-tile decoder loop and the per-M-tile
    # p-scratch caching.
    B, S, H, Vi, V = 2, 9, 32, 64, 1000

    key = jax.random.PRNGKey(0)
    keys = jax.random.split(key, 8)
    x = jax.random.normal(keys[0], (B, S, H), jnp.float32)

    params = {
        # transform.dense: nn.Linear(H, H).weight is [H, H]; stored as [in, out]
        "wd": jax.random.normal(keys[1], (H, H), jnp.float32) * 0.05,
        "bd": jax.random.normal(keys[2], (1, H), jnp.float32) * 0.05,
        # transform.LayerNorm affine params
        "gamma": 1.0 + 0.1 * jax.random.normal(keys[3], (1, H), jnp.float32),
        "beta": 0.1 * jax.random.normal(keys[4], (1, H), jnp.float32),
        # word_embeddings_projection: nn.Linear(Vi, H).weight has shape [H, Vi];
        # TransposeLinear.forward computes x @ weight, so store directly [H, Vi].
        "wproj": jax.random.normal(keys[5], (H, Vi), jnp.float32) * 0.05,
        # decoder: nn.Linear(Vi, V).weight is [V, Vi]; kernel consumes W^T=[Vi, V].
        "wdec": jax.random.normal(keys[6], (Vi, V), jnp.float32) * 0.05,
        # tied decoder bias, initialized to zeros exactly as in the module
        "bias": jnp.zeros((1, V), jnp.float32),
    }

    out = decomp_bert_lm_prediction_head(x, params)
    jax.block_until_ready(out)

    ref = reference(x, params)
    assert out.shape == (B, S, V), out.shape
    # Tolerance sized for bf16 MXU operands with f32 accumulation.
    np.testing.assert_allclose(np.asarray(out), np.asarray(ref),
                               rtol=3e-2, atol=3e-2)
    print("KERNEL_OK")
</pallas_src>

<mosaic_0001>
module attributes {stable_mosaic.version = 11 : i64} {
  func.func @lm_head_kernel(%arg0: i32, %arg1: i32, %arg2: memref<16x32xbf16, #tpu.memory_space<vmem>>, %arg3: memref<32x32xbf16, #tpu.memory_space<vmem>>, %arg4: memref<8x32xf32, #tpu.memory_space<vmem>>, %arg5: memref<32x64xbf16, #tpu.memory_space<vmem>>, %arg6: memref<64x512xbf16, #tpu.memory_space<vmem>>, %arg7: memref<1x512xf32, #tpu.memory_space<vmem>>, %arg8: memref<16x512xf32, #tpu.memory_space<vmem>>, %arg9: memref<16x64xbf16, #tpu.memory_space<vmem>>) attributes {dimension_semantics = [#tpu.dimension_semantics<parallel>, #tpu.dimension_semantics<arbitrary>], iteration_bounds = array<i64: 2, 2>, scalar_prefetch = 0 : i64, scratch_operands = 1 : i64, tpu.core_type = #tpu.core_type<tc>, window_params = [{transform_indices = @transform_0, window_bounds = array<i64: 16, 32>}, {pipeline_mode = #tpu.pipeline_mode<synchronous>, transform_indices = @transform_1, window_bounds = array<i64: 32, 32>}, {pipeline_mode = #tpu.pipeline_mode<synchronous>, transform_indices = @transform_2, window_bounds = array<i64: 8, 32>}, {pipeline_mode = #tpu.pipeline_mode<synchronous>, transform_indices = @transform_3, window_bounds = array<i64: 32, 64>}, {transform_indices = @transform_4, window_bounds = array<i64: 64, 512>}, {transform_indices = @transform_5, window_bounds = array<i64: 1, 512>}, {transform_indices = @transform_6, window_bounds = array<i64: 16, 512>}]} {
    %c0_i32 = arith.constant 0 : i32
    %0 = arith.cmpi eq, %arg1, %c0_i32 : i32
    %1 = arith.extui %0 : i1 to i32
    %c0_i32_0 = arith.constant 0 : i32
    %2 = arith.cmpi ne, %1, %c0_i32_0 : i32
    scf.if %2 {
      %c0_8 = arith.constant 0 : index
      %c0_9 = arith.constant 0 : index
      %10 = vector.load %arg4[%c0_8, %c0_9] : memref<8x32xf32, #tpu.memory_space<vmem>>, vector<8x32xf32>
      %c0_10 = arith.constant 0 : index
      %c0_11 = arith.constant 0 : index
      %11 = vector.load %arg2[%c0_10, %c0_11] : memref<16x32xbf16, #tpu.memory_space<vmem>>, vector<16x32xbf16>
      %c0_12 = arith.constant 0 : index
      %c0_13 = arith.constant 0 : index
      %12 = vector.load %arg3[%c0_12, %c0_13] : memref<32x32xbf16, #tpu.memory_space<vmem>>, vector<32x32xbf16>
      %cst_14 = arith.constant dense<0.000000e+00> : vector<16x32xf32>
      %13 = tpu.matmul %11, %12, %cst_14 {dimension_numbers = #tpu.dot_dimension_numbers<[1], [0], [0], [1], [0, 0, 1, 1], [], []>} : vector<16x32xbf16>, vector<32x32xbf16>, vector<16x32xf32> -> vector<16x32xf32>
      %14 = vector.extract_strided_slice %10 {offsets = [0, 0], sizes = [1, 32], strides = [1, 1]} : vector<8x32xf32> to vector<1x32xf32>
      %15 = vector.broadcast %14 : vector<1x32xf32> to vector<16x32xf32>
      %16 = arith.addf %13, %15 : vector<16x32xf32>
      %cst_15 = arith.constant 5.000000e-01 : f32
      %17 = vector.broadcast %cst_15 : f32 to vector<16x32xf32>
      %18 = arith.mulf %17, %16 : vector<16x32xf32>
      %cst_16 = arith.constant 0.707106769 : f32
      %19 = vector.broadcast %cst_16 : f32 to vector<16x32xf32>
      %20 = arith.mulf %16, %19 : vector<16x32xf32>
      %21 = math.erf %20 : vector<16x32xf32>
      %cst_17 = arith.constant 1.000000e+00 : f32
      %22 = vector.broadcast %cst_17 : f32 to vector<16x32xf32>
      %23 = arith.addf %22, %21 : vector<16x32xf32>
      %24 = arith.mulf %18, %23 : vector<16x32xf32>
      %cst_18 = arith.constant dense<0.000000e+00> : vector<16xf32>
      %25 = vector.multi_reduction <add>, %24, %cst_18 [1] : vector<16x32xf32> to vector<16xf32>
      %26 = vector.shape_cast %25 : vector<16xf32> to vector<16x1xf32>
      %cst_19 = arith.constant 3.200000e+01 : f32
      %27 = vector.broadcast %cst_19 : f32 to vector<16x1xf32>
      %28 = arith.divf %26, %27 : vector<16x1xf32>
      %29 = vector.broadcast %28 : vector<16x1xf32> to vector<16x32xf32>
      %30 = arith.subf %24, %29 : vector<16x32xf32>
      %31 = arith.mulf %30, %30 : vector<16x32xf32>
      %cst_20 = arith.constant dense<0.000000e+00> : vector<16xf32>
      %32 = vector.multi_reduction <add>, %31, %cst_20 [1] : vector<16x32xf32> to vector<16xf32>
      %33 = vector.shape_cast %32 : vector<16xf32> to vector<16x1xf32>
      %cst_21 = arith.constant 3.200000e+01 : f32
      %34 = vector.broadcast %cst_21 : f32 to vector<16x1xf32>
      %35 = arith.divf %33, %34 : vector<16x1xf32>
      %cst_22 = arith.constant 9.99999996E-13 : f32
      %36 = vector.broadcast %cst_22 : f32 to vector<16x1xf32>
      %37 = arith.addf %35, %36 : vector<16x1xf32>
      %38 = math.rsqrt %37 : vector<16x1xf32>
      %39 = vector.broadcast %38 : vector<16x1xf32> to vector<16x32xf32>
      %40 = arith.mulf %30, %39 : vector<16x32xf32>
      %41 = vector.extract_strided_slice %10 {offsets = [1, 0], sizes = [1, 32], strides = [1, 1]} : vector<8x32xf32> to vector<1x32xf32>
      %42 = vector.broadcast %41 : vector<1x32xf32> to vector<16x32xf32>
      %43 = arith.mulf %40, %42 : vector<16x32xf32>
      %44 = vector.extract_strided_slice %10 {offsets = [2, 0], sizes = [1, 32], strides = [1, 1]} : vector<8x32xf32> to vector<1x32xf32>
      %45 = vector.broadcast %44 : vector<1x32xf32> to vector<16x32xf32>
      %46 = arith.addf %43, %45 : vector<16x32xf32>
      %47 = arith.truncf %46 : vector<16x32xf32> to vector<16x32xbf16>
      %c0_23 = arith.constant 0 : index
      %c0_24 = arith.constant 0 : index
      %48 = vector.load %arg5[%c0_23, %c0_24] : memref<32x64xbf16, #tpu.memory_space<vmem>>, vector<32x64xbf16>
      %cst_25 = arith.constant dense<0.000000e+00> : vector<16x64xf32>
      %49 = tpu.matmul %47, %48, %cst_25 {dimension_numbers = #tpu.dot_dimension_numbers<[1], [0], [0], [1], [0, 0, 1, 1], [], []>} : vector<16x32xbf16>, vector<32x64xbf16>, vector<16x64xf32> -> vector<16x64xf32>
      %50 = arith.truncf %49 : vector<16x64xf32> to vector<16x64xbf16>
      %c0_26 = arith.constant 0 : index
      %c0_27 = arith.constant 0 : index
      %51 = vector.load %arg9[%c0_26, %c0_27] : memref<16x64xbf16, #tpu.memory_space<vmem>>, vector<16x64xbf16>
      tpu.vector_store %arg9[%c0_26, %c0_27], %50 {strides = array<i32>} : memref<16x64xbf16, #tpu.memory_space<vmem>>, vector<16x64xbf16>,
    } else {
    }
    %c0 = arith.constant 0 : index
    %c0_1 = arith.constant 0 : index
    %3 = vector.load %arg9[%c0, %c0_1] : memref<16x64xbf16, #tpu.memory_space<vmem>>, vector<16x64xbf16>
    %c0_2 = arith.constant 0 : index
    %c0_3 = arith.constant 0 : index
    %4 = vector.load %arg6[%c0_2, %c0_3] : memref<64x512xbf16, #tpu.memory_space<vmem>>, vector<64x512xbf16>
    %cst = arith.constant dense<0.000000e+00> : vector<16x512xf32>
    %5 = tpu.matmul %3, %4, %cst {dimension_numbers = #tpu.dot_dimension_numbers<[1], [0], [0], [1], [0, 0, 1, 1], [], []>} : vector<16x64xbf16>, vector<64x512xbf16>, vector<16x512xf32> -> vector<16x512xf32>
    %c0_4 = arith.constant 0 : index
    %c0_5 = arith.constant 0 : index
    %6 = vector.load %arg7[%c0_4, %c0_5] : memref<1x512xf32, #tpu.memory_space<vmem>>, vector<1x512xf32>
    %7 = vector.broadcast %6 : vector<1x512xf32> to vector<16x512xf32>
    %8 = arith.addf %5, %7 : vector<16x512xf32>
    %c0_6 = arith.constant 0 : index
    %c0_7 = arith.constant 0 : index
    %9 = vector.load %arg8[%c0_6, %c0_7] : memref<16x512xf32, #tpu.memory_space<vmem>>, vector<16x512xf32>
    tpu.vector_store %arg8[%c0_6, %c0_7], %8 {strides = array<i32>} : memref<16x512xf32, #tpu.memory_space<vmem>>, vector<16x512xf32>,
    return
  }
  func.func @transform_0(%arg0: i32, %arg1: i32) -> (i32, i32) {
    %c0_i32 = arith.constant 0 : i32
    %c0_i32_0 = arith.constant 0 : i32
    return %arg0, %c0_i32 : i32, i32
  }
  func.func @transform_1(%arg0: i32, %arg1: i32) -> (i32, i32) {
    %c0_i32 = arith.constant 0 : i32
    %c0_i32_0 = arith.constant 0 : i32
    %c0_i32_1 = arith.constant 0 : i32
    return %c0_i32, %c0_i32_0 : i32, i32
  }
  func.func @transform_2(%arg0: i32, %arg1: i32) -> (i32, i32) {
    %c0_i32 = arith.constant 0 : i32
    %c0_i32_0 = arith.constant 0 : i32
    %c0_i32_1 = arith.constant 0 : i32
    return %c0_i32, %c0_i32_0 : i32, i32
  }
  func.func @transform_3(%arg0: i32, %arg1: i32) -> (i32, i32) {
    %c0_i32 = arith.constant 0 : i32
    %c0_i32_0 = arith.constant 0 : i32
    %c0_i32_1 = arith.constant 0 : i32
    return %c0_i32, %c0_i32_0 : i32, i32
  }
  func.func @transform_4(%arg0: i32, %arg1: i32) -> (i32, i32) {
    %c0_i32 = arith.constant 0 : i32
    %c0_i32_0 = arith.constant 0 : i32
    return %c0_i32, %arg1 : i32, i32
  }
  func.func @transform_5(%arg0: i32, %arg1: i32) -> (i32, i32) {
    %c0_i32 = arith.constant 0 : i32
    %c0_i32_0 = arith.constant 0 : i32
    return %c0_i32, %arg1 : i32, i32
  }
  func.func @transform_6(%arg0: i32, %arg1: i32) -> (i32, i32) {
    %c0_i32 = arith.constant 0 : i32
    return %arg0, %arg1 : i32, i32
  }
}

module attributes {stable_mosaic.version = 11 : i64} {
  func.func @lm_head_kernel(%arg0: i32, %arg1: i32, %arg2: memref<16x32xbf16, #tpu.memory_space<vmem>>, %arg3: memref<32x32xbf16, #tpu.memory_space<vmem>>, %arg4: memref<8x32xf32, #tpu.memory_space<vmem>>, %arg5: memref<32x64xbf16, #tpu.memory_space<vmem>>, %arg6: memref<64x512xbf16, #tpu.memory_space<vmem>>, %arg7: memref<1x512xf32, #tpu.memory_space<vmem>>, %arg8: memref<16x512xf32, #tpu.memory_space<vmem>>, %arg9: memref<16x64xbf16, #tpu.memory_space<vmem>>) attributes {dimension_semantics = [#tpu.dimension_semantics<parallel>, #tpu.dimension_semantics<arbitrary>], iteration_bounds = array<i64: 2, 2>, scalar_prefetch = 0 : i64, scratch_operands = 1 : i64, tpu.core_type = #tpu.core_type<tc>, window_params = [{transform_indices = @transform_0, window_bounds = array<i64: 16, 32>}, {pipeline_mode = #tpu.pipeline_mode<synchronous>, transform_indices = @transform_1, window_bounds = array<i64: 32, 32>}, {pipeline_mode = #tpu.pipeline_mode<synchronous>, transform_indices = @transform_2, window_bounds = array<i64: 8, 32>}, {pipeline_mode = #tpu.pipeline_mode<synchronous>, transform_indices = @transform_3, window_bounds = array<i64: 32, 64>}, {transform_indices = @transform_4, window_bounds = array<i64: 64, 512>}, {transform_indices = @transform_5, window_bounds = array<i64: 1, 512>}, {transform_indices = @transform_6, window_bounds = array<i64: 16, 512>}]} {
    %c0_i32 = arith.constant 0 : i32
    %0 = arith.cmpi eq, %arg1, %c0_i32 : i32
    %1 = arith.extui %0 : i1 to i32
    %c0_i32_0 = arith.constant 0 : i32
    %2 = arith.cmpi ne, %1, %c0_i32_0 : i32
    scf.if %2 {
      %c0_8 = arith.constant 0 : index
      %c0_9 = arith.constant 0 : index
      %10 = vector.load %arg4[%c0_8, %c0_9] : memref<8x32xf32, #tpu.memory_space<vmem>>, vector<8x32xf32>
      %c0_10 = arith.constant 0 : index
      %c0_11 = arith.constant 0 : index
      %11 = vector.load %arg2[%c0_10, %c0_11] : memref<16x32xbf16, #tpu.memory_space<vmem>>, vector<16x32xbf16>
      %c0_12 = arith.constant 0 : index
      %c0_13 = arith.constant 0 : index
      %12 = vector.load %arg3[%c0_12, %c0_13] : memref<32x32xbf16, #tpu.memory_space<vmem>>, vector<32x32xbf16>
      %cst_14 = arith.constant dense<0.000000e+00> : vector<16x32xf32>
      %13 = tpu.matmul %11, %12, %cst_14 {dimension_numbers = #tpu.dot_dimension_numbers<[1], [0], [0], [1], [0, 0, 1, 1], [], []>} : vector<16x32xbf16>, vector<32x32xbf16>, vector<16x32xf32> -> vector<16x32xf32>
      %14 = vector.extract_strided_slice %10 {offsets = [0, 0], sizes = [1, 32], strides = [1, 1]} : vector<8x32xf32> to vector<1x32xf32>
      %15 = vector.broadcast %14 : vector<1x32xf32> to vector<16x32xf32>
      %16 = arith.addf %13, %15 : vector<16x32xf32>
      %cst_15 = arith.constant 5.000000e-01 : f32
      %17 = vector.broadcast %cst_15 : f32 to vector<16x32xf32>
      %18 = arith.mulf %17, %16 : vector<16x32xf32>
      %cst_16 = arith.constant 0.707106769 : f32
      %19 = vector.broadcast %cst_16 : f32 to vector<16x32xf32>
      %20 = arith.mulf %16, %19 : vector<16x32xf32>
      %21 = math.erf %20 : vector<16x32xf32>
      %cst_17 = arith.constant 1.000000e+00 : f32
      %22 = vector.broadcast %cst_17 : f32 to vector<16x32xf32>
      %23 = arith.addf %22, %21 : vector<16x32xf32>
      %24 = arith.mulf %18, %23 : vector<16x32xf32>
      %cst_18 = arith.constant dense<0.000000e+00> : vector<16xf32>
      %25 = vector.multi_reduction <add>, %24, %cst_18 [1] : vector<16x32xf32> to vector<16xf32>
      %26 = vector.shape_cast %25 : vector<16xf32> to vector<16x1xf32>
      %cst_19 = arith.constant 3.200000e+01 : f32
      %27 = vector.broadcast %cst_19 : f32 to vector<16x1xf32>
      %28 = arith.divf %26, %27 : vector<16x1xf32>
      %29 = vector.broadcast %28 : vector<16x1xf32> to vector<16x32xf32>
      %30 = arith.subf %24, %29 : vector<16x32xf32>
      %31 = arith.mulf %30, %30 : vector<16x32xf32>
      %cst_20 = arith.constant dense<0.000000e+00> : vector<16xf32>
      %32 = vector.multi_reduction <add>, %31, %cst_20 [1] : vector<16x32xf32> to vector<16xf32>
      %33 = vector.shape_cast %32 : vector<16xf32> to vector<16x1xf32>
      %cst_21 = arith.constant 3.200000e+01 : f32
      %34 = vector.broadcast %cst_21 : f32 to vector<16x1xf32>
      %35 = arith.divf %33, %34 : vector<16x1xf32>
      %cst_22 = arith.constant 9.99999996E-13 : f32
      %36 = vector.broadcast %cst_22 : f32 to vector<16x1xf32>
      %37 = arith.addf %35, %36 : vector<16x1xf32>
      %38 = math.rsqrt %37 : vector<16x1xf32>
      %39 = vector.broadcast %38 : vector<16x1xf32> to vector<16x32xf32>
      %40 = arith.mulf %30, %39 : vector<16x32xf32>
      %41 = vector.extract_strided_slice %10 {offsets = [1, 0], sizes = [1, 32], strides = [1, 1]} : vector<8x32xf32> to vector<1x32xf32>
      %42 = vector.broadcast %41 : vector<1x32xf32> to vector<16x32xf32>
      %43 = arith.mulf %40, %42 : vector<16x32xf32>
      %44 = vector.extract_strided_slice %10 {offsets = [2, 0], sizes = [1, 32], strides = [1, 1]} : vector<8x32xf32> to vector<1x32xf32>
      %45 = vector.broadcast %44 : vector<1x32xf32> to vector<16x32xf32>
      %46 = arith.addf %43, %45 : vector<16x32xf32>
      %47 = arith.truncf %46 : vector<16x32xf32> to vector<16x32xbf16>
      %c0_23 = arith.constant 0 : index
      %c0_24 = arith.constant 0 : index
      %48 = vector.load %arg5[%c0_23, %c0_24] : memref<32x64xbf16, #tpu.memory_space<vmem>>, vector<32x64xbf16>
      %cst_25 = arith.constant dense<0.000000e+00> : vector<16x64xf32>
      %49 = tpu.matmul %47, %48, %cst_25 {dimension_numbers = #tpu.dot_dimension_numbers<[1], [0], [0], [1], [0, 0, 1, 1], [], []>} : vector<16x32xbf16>, vector<32x64xbf16>, vector<16x64xf32> -> vector<16x64xf32>
      %50 = arith.truncf %49 : vector<16x64xf32> to vector<16x64xbf16>
      %c0_26 = arith.constant 0 : index
      %c0_27 = arith.constant 0 : index
      %51 = vector.load %arg9[%c0_26, %c0_27] : memref<16x64xbf16, #tpu.memory_space<vmem>>, vector<16x64xbf16>
      tpu.vector_store %arg9[%c0_26, %c0_27], %50 {strides = array<i32>} : memref<16x64xbf16, #tpu.memory_space<vmem>>, vector<16x64xbf16>,
    } else {
    }
    %c0 = arith.constant 0 : index
    %c0_1 = arith.constant 0 : index
    %3 = vector.load %arg9[%c0, %c0_1] : memref<16x64xbf16, #tpu.memory_space<vmem>>, vector<16x64xbf16>
    %c0_2 = arith.constant 0 : index
    %c0_3 = arith.constant 0 : index
    %4 = vector.load %arg6[%c0_2, %c0_3] : memref<64x512xbf16, #tpu.memory_space<vmem>>, vector<64x512xbf16>
    %cst = arith.constant dense<0.000000e+00> : vector<16x512xf32>
    %5 = tpu.matmul %3, %4, %cst {dimension_numbers = #tpu.dot_dimension_numbers<[1], [0], [0], [1], [0, 0, 1, 1], [], []>} : vector<16x64xbf16>, vector<64x512xbf16>, vector<16x512xf32> -> vector<16x512xf32>
    %c0_4 = arith.constant 0 : index
    %c0_5 = arith.constant 0 : index
    %6 = vector.load %arg7[%c0_4, %c0_5] : memref<1x512xf32, #tpu.memory_space<vmem>>, vector<1x512xf32>
    %7 = vector.broadcast %6 : vector<1x512xf32> to vector<16x512xf32>
    %8 = arith.addf %5, %7 : vector<16x512xf32>
    %c0_6 = arith.constant 0 : index
    %c0_7 = arith.constant 0 : index
    %9 = vector.load %arg8[%c0_6, %c0_7] : memref<16x512xf32, #tpu.memory_space<vmem>>, vector<16x512xf32>
    tpu.vector_store %arg8[%c0_6, %c0_7], %8 {strides = array<i32>} : memref<16x512xf32, #tpu.memory_space<vmem>>, vector<16x512xf32>,
    return
  }
  func.func @transform_0(%arg0: i32, %arg1: i32) -> (i32, i32) {
    %c0_i32 = arith.constant 0 : i32
    %c0_i32_0 = arith.constant 0 : i32
    return %arg0, %c0_i32 : i32, i32
  }
  func.func @transform_1(%arg0: i32, %arg1: i32) -> (i32, i32) {
    %c0_i32 = arith.constant 0 : i32
    %c0_i32_0 = arith.constant 0 : i32
    %c0_i32_1 = arith.constant 0 : i32
    return %c0_i32, %c0_i32_0 : i32, i32
  }
  func.func @transform_2(%arg0: i32, %arg1: i32) -> (i32, i32) {
    %c0_i32 = arith.constant 0 : i32
    %c0_i32_0 = arith.constant 0 : i32
    %c0_i32_1 = arith.constant 0 : i32
    return %c0_i32, %c0_i32_0 : i32, i32
  }
  func.func @transform_3(%arg0: i32, %arg1: i32) -> (i32, i32) {
    %c0_i32 = arith.constant 0 : i32
    %c0_i32_0 = arith.constant 0 : i32
    %c0_i32_1 = arith.constant 0 : i32
    return %c0_i32, %c0_i32_0 : i32, i32
  }
  func.func @transform_4(%arg0: i32, %arg1: i32) -> (i32, i32) {
    %c0_i32 = arith.constant 0 : i32
    %c0_i32_0 = arith.constant 0 : i32
    return %c0_i32, %arg1 : i32, i32
  }
  func.func @transform_5(%arg0: i32, %arg1: i32) -> (i32, i32) {
    %c0_i32 = arith.constant 0 : i32
    %c0_i32_0 = arith.constant 0 : i32
    return %c0_i32, %arg1 : i32, i32
  }
  func.func @transform_6(%arg0: i32, %arg1: i32) -> (i32, i32) {
    %c0_i32 = arith.constant 0 : i32
    return %arg0, %arg1 : i32, i32
  }
}

</mosaic_0001>

<llo_original>
// kernel: tpu_custom_call.1
$region0: #{tpu_custom_call.1}
  #allocation0 [shape = 'u32[]', space=smem, size = 0x4, offset = 0x4, fixed_abs, tag = 'smem constant byte address 0x4 - core index']
  #allocation1 [shape = 'u32[72,128]{1,0:T(1,128)}', space=vmem, size = 0x9000, scoped, tag = 'internal scratch']
  #allocation2 [shape = 'bf16[16,64]{1,0:T(8,128)(2,1)}', space=vmem, size = 0x1000, scoped, tag = 'scratch operand']
  %s0 = inlined_call_operand.hbm [shape: bf16[32,32], index: 0, kind: input, shape index: {}]
  %s1 = inlined_call_operand.hbm [shape: bf16[32,32], index: 1, kind: input, shape index: {}]
  %s2 = inlined_call_operand.hbm [shape: f32[8,32], index: 2, kind: input, shape index: {}]
  %s3 = inlined_call_operand.hbm [shape: bf16[32,64], index: 3, kind: input, shape index: {}]
  %s4 = inlined_call_operand.hbm [shape: bf16[64,1024], index: 4, kind: input, shape index: {}]
  %s5 = inlined_call_operand.hbm [shape: f32[1,1024], index: 5, kind: input, shape index: {}]
  %s6 = inlined_call_operand.hbm [shape: f32[32,1024], index: 6, kind: output, shape index: {}]
  %s7 = sld [smem:[#allocation0]]
  $region85: #{tpu_custom_call.1} parent=0
    _
  %s9 = ssub.s32 1, %s7
  %s10 = scalar_select 0, %s9, %s7
  $region1: #{tpu_custom_call.1} parent=0
    #allocation3 [shape = 'u8[8192]{0}', space=vmem, size = 0x2000, scoped, tag = 'input window, operand 0']
    #allocation4 [shape = 's32[2]{0}', space=sflag, size = 0x8, scoped, tag = 'scoped memory for tpu_custom_call.1']
    #allocation5 [shape = 's32[2]{0}', space=sflag, size = 0x8, scoped, tag = 'scoped memory for tpu_custom_call.1']
    #allocation6 [shape = 'u8[8192]{0}', space=vmem, size = 0x2000, scoped, tag = 'input window, operand 1, single buffered']
    #allocation7 [shape = 's32[1]{0}', space=sflag, size = 0x4, scoped, tag = 'scoped memory for tpu_custom_call.1']
    #allocation8 [shape = 'u8[4096]{0}', space=vmem, size = 0x1000, scoped, tag = 'input window, operand 2, single buffered']
    #allocation9 [shape = 'u8[8192]{0}', space=vmem, size = 0x2000, scoped, tag = 'input window, operand 3, single buffered']
    #allocation10 [shape = 's32[1]{0}', space=sflag, size = 0x4, scoped, tag = 'scoped memory for tpu_custom_call.1']
    #allocation11 [shape = 'u8[131072]{0}', space=vmem, size = 0x20000, scoped, tag = 'input window, operand 4']
    #allocation12 [shape = 'u8[4096]{0}', space=vmem, size = 0x1000, scoped, tag = 'input window, operand 5']
    #allocation13 [shape = 'u8[65536]{0}', space=vmem, size = 0x10000, scoped, tag = 'output window, operand 0']
    %11 = vsyncpa [#allocation4], 0
    %s12 = scalar_lea.sflag [#allocation4], 1
    %13 = vsyncpa %s12, 0
    %14 = vsyncpa [#allocation7], 0
    %15 = vsyncpa [#allocation10], 0
    %16 = vsyncpa [#allocation5], 0
    %s17 = scalar_lea.sflag [#allocation5], 1
    %18 = vsyncpa %s17, 0
    loop: start=0, step=1, limit=6
    $region2: #{tpu_custom_call.1} parent=1 // loop_pre_header
      _
    $region3: #{tpu_custom_call.1} parent=1 // loop_header
      %s20 = sphi 0, %s24
      %p21 = scmp.ge.s32.totalorder %s20, 6
      %s27 = sphi 0, %s39
      %s28 = sphi 0, %s35
      %s29 = sphi 0, %s27
      %s30 = sphi 0, %s28
      %s31 = sphi 0, %s29
      %s32 = sphi 0, %s30
      %s42 = sphi 0, %s44
      %s45 = sphi 0, %s42
      %s46 = sphi 0, %s45
      %s62 = sphi 0, %s46
      %s66 = sphi 0, %s66
      %s68 = sphi 0, %s66
      %s69 = sphi 0, %s68
      %s83 = sphi 0, %s69
      %s87 = sphi 0, %s87
      %s89 = sphi 0, %s87
      %s90 = sphi 0, %s89
      %s104 = sphi 0, %s90
      %s108 = sphi 0, %s108
      %s110 = sphi 0, %s108
      %s111 = sphi 0, %s110
      %s125 = sphi 0, %s111
      %s131 = sphi 0, %s133
      %s134 = sphi 0, %s131
      %s135 = sphi 0, %s134
      %s151 = sphi 0, %s135
      %s157 = sphi 0, %s159
      %s160 = sphi 0, %s157
      %s161 = sphi 0, %s160
      %s177 = sphi 0, %s161
      %s185 = sphi 0, %s187
      %s188 = sphi 0, %s185
      %s189 = sphi 0, %s188
      %s205 = sphi 0, %s189
    $region4: #{tpu_custom_call.1} parent=1 // loop_header_branch
      %23 = sbr.rel (%p21) target = $region8
    $region5: #{tpu_custom_call.1} parent=1 // loop_body
      %s25 = ssub.s32 %s20, 1
      %s26 = ssub.s32 %s20, 2
      %s33 = sadd.s32 1, %s28
      %p34 = scmp.ge.s32.totalorder %s33, 2
      %s35 = scalar_select %p34, 0, %s33
      %s36 = sadd.s32 1, %s27
      %s37 = scalar_select %p34, %s36, %s27
      %p38 = scmp.ge.s32.totalorder %s37, 2
      %s39 = scalar_select %p38, 0, %s37
      %s40 = ssub.s32 %s27, %s39
      %p41 = scmp.eq.s32.totalorder %s40, 0
      %s43 = sadd.s32 %s42, 1
      %s44 = scalar_select %p41, %s42, %s43
      %p47 = pneg %p41
      %p48 = scmp.eq.s32.totalorder %s20, 3
      %p49 = por %p47, %p48
      %p50 = scmp.ne.s32.totalorder %s42, %s45
      %p51 = scmp.eq.s32.totalorder %s20, 0
      %p52 = por %p50, %p51
      %p53 = scmp.ne.s32.totalorder %s42, %s45
      %p54 = scmp.eq.s32.totalorder %s25, 3
      %p55 = por %p53, %p54
      %p56 = scmp.ne.s32.totalorder %s45, %s46
      %p57 = scmp.eq.s32.totalorder %s25, 0
      %p58 = por %p56, %p57
      %p59 = scmp.ne.s32.totalorder %s45, %s46
      %p60 = scmp.eq.s32.totalorder %s26, 3
      %p61 = por %p59, %p60
      %p63 = scmp.ne.s32.totalorder %s46, %s62
      %p64 = scmp.eq.s32.totalorder %s26, 0
      %p65 = por %p63, %p64
      %s67 = sadd.s32 %s66, 1
      %p70 = scmp.eq.s32.totalorder %s20, 3
      %p71 = scmp.ne.s32.totalorder %s66, %s68
      %p72 = scmp.eq.s32.totalorder %s20, 0
      %p73 = por %p71, %p72
      %p74 = scmp.ne.s32.totalorder %s66, %s68
      %p75 = scmp.eq.s32.totalorder %s25, 3
      %p76 = por %p74, %p75
      %p77 = scmp.ne.s32.totalorder %s68, %s69
      %p78 = scmp.eq.s32.totalorder %s25, 0
      %p79 = por %p77, %p78
      %p80 = scmp.ne.s32.totalorder %s68, %s69
      %p81 = scmp.eq.s32.totalorder %s26, 3
      %p82 = por %p80, %p81
      %p84 = scmp.ne.s32.totalorder %s69, %s83
      %p85 = scmp.eq.s32.totalorder %s26, 0
      %p86 = por %p84, %p85
      %s88 = sadd.s32 %s87, 1
      %p91 = scmp.eq.s32.totalorder %s20, 3
      %p92 = scmp.ne.s32.totalorder %s87, %s89
      %p93 = scmp.eq.s32.totalorder %s20, 0
      %p94 = por %p92, %p93
      %p95 = scmp.ne.s32.totalorder %s87, %s89
      %p96 = scmp.eq.s32.totalorder %s25, 3
      %p97 = por %p95, %p96
      %p98 = scmp.ne.s32.totalorder %s89, %s90
      %p99 = scmp.eq.s32.totalorder %s25, 0
      %p100 = por %p98, %p99
      %p101 = scmp.ne.s32.totalorder %s89, %s90
      %p102 = scmp.eq.s32.totalorder %s26, 3
      %p103 = por %p101, %p102
      %p105 = scmp.ne.s32.totalorder %s90, %s104
      %p106 = scmp.eq.s32.totalorder %s26, 0
      %p107 = por %p105, %p106
      %s109 = sadd.s32 %s108, 1
      %p112 = scmp.eq.s32.totalorder %s20, 3
      %p113 = scmp.ne.s32.totalorder %s108, %s110
      %p114 = scmp.eq.s32.totalorder %s20, 0
      %p115 = por %p113, %p114
      %p116 = scmp.ne.s32.totalorder %s108, %s110
      %p117 = scmp.eq.s32.totalorder %s25, 3
      %p118 = por %p116, %p117
      %p119 = scmp.ne.s32.totalorder %s110, %s111
      %p120 = scmp.eq.s32.totalorder %s25, 0
      %p121 = por %p119, %p120
      %p122 = scmp.ne.s32.totalorder %s110, %s111
      %p123 = scmp.eq.s32.totalorder %s26, 3
      %p124 = por %p122, %p123
      %p126 = scmp.ne.s32.totalorder %s111, %s125
      %p127 = scmp.eq.s32.totalorder %s26, 0
      %p128 = por %p126, %p127
      %s129 = ssub.s32 %s28, %s35
      %p130 = scmp.eq.s32.totalorder %s129, 0
      %s132 = sadd.s32 %s131, 1
      %s133 = scalar_select %p130, %s131, %s132
      %p136 = pneg %p130
      %p137 = scmp.eq.s32.totalorder %s20, 3
      %p138 = por %p136, %p137
      %p139 = scmp.ne.s32.totalorder %s131, %s134
      %p140 = scmp.eq.s32.totalorder %s20, 0
      %p141 = por %p139, %p140
      %p142 = scmp.ne.s32.totalorder %s131, %s134
      %p143 = scmp.eq.s32.totalorder %s25, 3
      %p144 = por %p142, %p143
      %p145 = scmp.ne.s32.totalorder %s134, %s135
      %p146 = scmp.eq.s32.totalorder %s25, 0
      %p147 = por %p145, %p146
      %p148 = scmp.ne.s32.totalorder %s134, %s135
      %p149 = scmp.eq.s32.totalorder %s26, 3
      %p150 = por %p148, %p149
      %p152 = scmp.ne.s32.totalorder %s135, %s151
      %p153 = scmp.eq.s32.totalorder %s26, 0
      %p154 = por %p152, %p153
      %s155 = ssub.s32 %s28, %s35
      %p156 = scmp.eq.s32.totalorder %s155, 0
      %s158 = sadd.s32 %s157, 1
      %s159 = scalar_select %p156, %s157, %s158
      %p162 = pneg %p156
      %p163 = scmp.eq.s32.totalorder %s20, 3
      %p164 = por %p162, %p163
      %p165 = scmp.ne.s32.totalorder %s157, %s160
      %p166 = scmp.eq.s32.totalorder %s20, 0
      %p167 = por %p165, %p166
      %p168 = scmp.ne.s32.totalorder %s157, %s160
      %p169 = scmp.eq.s32.totalorder %s25, 3
      %p170 = por %p168, %p169
      %p171 = scmp.ne.s32.totalorder %s160, %s161
      %p172 = scmp.eq.s32.totalorder %s25, 0
      %p173 = por %p171, %p172
      %p174 = scmp.ne.s32.totalorder %s160, %s161
      %p175 = scmp.eq.s32.totalorder %s26, 3
      %p176 = por %p174, %p175
      %p178 = scmp.ne.s32.totalorder %s161, %s177
      %p179 = scmp.eq.s32.totalorder %s26, 0
      %p180 = por %p178, %p179
      %s181 = ssub.s32 %s27, %s39
      %s182 = ssub.s32 %s28, %s35
      %s183 = sor.u32 %s181, %s182
      %p184 = scmp.eq.s32.totalorder %s183, 0
      %s186 = sadd.s32 %s185, 1
      %s187 = scalar_select %p184, %s185, %s186
      %p190 = pneg %p184
      %p191 = scmp.eq.s32.totalorder %s20, 3
      %p192 = por %p190, %p191
      %p193 = scmp.ne.s32.totalorder %s185, %s188
      %p194 = scmp.eq.s32.totalorder %s20, 0
      %p195 = por %p193, %p194
      %p196 = scmp.ne.s32.totalorder %s185, %s188
      %p197 = scmp.eq.s32.totalorder %s25, 3
      %p198 = por %p196, %p197
      %p199 = scmp.ne.s32.totalorder %s188, %s189
      %p200 = scmp.eq.s32.totalorder %s25, 0
      %p201 = por %p199, %p200
      %p202 = scmp.ne.s32.totalorder %s188, %s189
      %p203 = scmp.eq.s32.totalorder %s26, 3
      %p204 = por %p202, %p203
      %p206 = scmp.ne.s32.totalorder %s189, %s205
      %p207 = scmp.eq.s32.totalorder %s26, 0
      %p208 = por %p206, %p207
      %p209 = scmp.le.s32.totalorder 1, %s20
      %p210 = scmp.lt.s32.totalorder %s20, 5
      %p211 = pnand %p209, %p210
      %p212 = pneg %p211
      // Predicated region
      $region9: #{tpu_custom_call.1} parent=5 // pred_check
        _
      $region10: #{tpu_custom_call.1} parent=5 // pred_check_branch
        %214 = sbr.rel (%p211) target = $region12
      $region11: #{tpu_custom_call.1} parent=5 // pred_region
        %s215 = ssub.s32 %s20, 1
        // Predicated region
        $region13: #{tpu_custom_call.1} parent=11 // pred_check
          %p216 = pneg %p79
        $region14: #{tpu_custom_call.1} parent=11 // pred_check_branch
          %218 = sbr.rel (%p216) target = $region16
        $region15: #{tpu_custom_call.1} parent=11 // pred_region
          %220 = vsyncadd [#allocation7], 0
          %s221 = sshll.u32 %s1, 4
          %s222 = int_to_ptr.hbm [resolvable:$true] %s221
          %s223 = sshll.u32 [#allocation6], 4
          %s224 = int_to_ptr.vmem [resolvable:$true] %s223
          %229 = dma.hbm_to_vmem [thread:$0]  %s222, 256, %s224, [#allocation7], 64, 64, 4
        $region16: #{tpu_custom_call.1} parent=11 // pred_fallthru
          _
        // Predicated region
        $region17: #{tpu_custom_call.1} parent=11 // pred_check
          %p230 = pneg %p100
        $region18: #{tpu_custom_call.1} parent=11 // pred_check_branch
          %232 = sbr.rel (%p230) target = $region20
        $region19: #{tpu_custom_call.1} parent=11 // pred_region
          %234 = vsyncadd [#allocation7], 0
          %s236 = sshll.u32 %s2, 4
          %s237 = int_to_ptr.hbm [resolvable:$true] %s236
          %s238 = sshll.u32 [#allocation8], 4
          %s239 = int_to_ptr.vmem [resolvable:$true] %s238
          %241 = dma.hbm_to_vmem [thread:$0]  %s237, 128, %s239, [#allocation7]
        $region20: #{tpu_custom_call.1} parent=11 // pred_fallthru
          _
        // Predicated region
        $region21: #{tpu_custom_call.1} parent=11 // pred_check
          %p242 = pneg %p121
        $region22: #{tpu_custom_call.1} parent=11 // pred_check_branch
          %244 = sbr.rel (%p242) target = $region24
        $region23: #{tpu_custom_call.1} parent=11 // pred_region
          %246 = vsyncadd [#allocation10], 0
          %s247 = sshll.u32 %s3, 4
          %s248 = int_to_ptr.hbm [resolvable:$true] %s247
          %s249 = sshll.u32 [#allocation9], 4
          %s250 = int_to_ptr.vmem [resolvable:$true] %s249
          %255 = dma.hbm_to_vmem [thread:$0]  %s248, 256, %s250, [#allocation10], 64, 64, 4
        $region24: #{tpu_custom_call.1} parent=11 // pred_fallthru
          _
      $region12: #{tpu_custom_call.1} parent=5 // pred_fallthru
        _
      %p256 = scmp.lt.s32.totalorder %s20, 4
      // Predicated region
      $region25: #{tpu_custom_call.1} parent=5 // pred_check
        %p257 = pneg %p256
      $region26: #{tpu_custom_call.1} parent=5 // pred_check_branch
        %259 = sbr.rel (%p257) target = $region28
      $region27: #{tpu_custom_call.1} parent=5 // pred_region
        // Predicated region
        $region29: #{tpu_custom_call.1} parent=27 // pred_check
          %p260 = pneg %p52
        $region30: #{tpu_custom_call.1} parent=27 // pred_check_branch
          %262 = sbr.rel (%p260) target = $region32
        $region31: #{tpu_custom_call.1} parent=27 // pred_region
          %s263 = sand.u32 %s20, 1
          %s264 = scalar_lea.sflag [#allocation4], %s263
          %s265 = sand.u32 %s42, 1
          %s266 = smul.addr %s265, 8
          %s267 = scalar_lea.vmem [#allocation3], %s266
          %s268 = smul.u32 2, %s27
          %270 = vsyncadd %s264, 0
          %s271 = smul.addr %s268, 4
          %s272 = scalar_lea.hbm %s0, %s271
          %s273 = sshll.u32 %s272, 4
          %s274 = int_to_ptr.hbm [resolvable:$true] %s273
          %s275 = sshll.u32 %s267, 4
          %s276 = int_to_ptr.vmem [resolvable:$true] %s275
          %281 = dma.hbm_to_vmem [thread:$0]  %s274, 128, %s276, %s264, 64, 64, 4
        $region32: #{tpu_custom_call.1} parent=27 // pred_fallthru
          _
        // Predicated region
        $region33: #{tpu_custom_call.1} parent=27 // pred_check
          %p282 = pneg %p141
        $region34: #{tpu_custom_call.1} parent=27 // pred_check_branch
          %284 = sbr.rel (%p282) target = $region36
        $region35: #{tpu_custom_call.1} parent=27 // pred_region
          %s285 = sand.u32 %s20, 1
          %s286 = scalar_lea.sflag [#allocation4], %s285
          %s287 = sand.u32 %s131, 1
          %s288 = smul.addr %s287, 128
          %s289 = scalar_lea.vmem [#allocation11], %s288
          %s290 = smul.u32 4, %s28
          %292 = vsyncadd %s286, 0
          %s293 = smul.addr %s290, 4
          %s294 = scalar_lea.hbm %s4, %s293
          %s295 = sshll.u32 %s294, 4
          %s296 = int_to_ptr.hbm [resolvable:$true] %s295
          %s297 = sshll.u32 %s289, 4
          %s298 = int_to_ptr.vmem [resolvable:$true] %s297
          %303 = dma.hbm_to_vmem [thread:$0]  %s296, 2048, %s298, %s286, 512, 256, 16
        $region36: #{tpu_custom_call.1} parent=27 // pred_fallthru
          _
        // Predicated region
        $region37: #{tpu_custom_call.1} parent=27 // pred_check
          %p304 = pneg %p167
        $region38: #{tpu_custom_call.1} parent=27 // pred_check_branch
          %306 = sbr.rel (%p304) target = $region40
        $region39: #{tpu_custom_call.1} parent=27 // pred_region
          %s307 = sand.u32 %s20, 1
          %s308 = scalar_lea.sflag [#allocation4], %s307
          %s309 = sand.u32 %s157, 1
          %s310 = smul.addr %s309, 4
          %s311 = scalar_lea.vmem [#allocation12], %s310
          %s312 = smul.u32 4, %s28
          %314 = vsyncadd %s308, 0
          %s315 = scalar_lea.hbm %s5, %s312
          %s317 = sshll.u32 %s315, 4
          %s318 = int_to_ptr.hbm [resolvable:$true] %s317
          %s319 = sshll.u32 %s311, 4
          %s320 = int_to_ptr.vmem [resolvable:$true] %s319
          %322 = dma.hbm_to_vmem [thread:$0]  %s318, 64, %s320, %s308
        $region40: #{tpu_custom_call.1} parent=27 // pred_fallthru
          _
      $region28: #{tpu_custom_call.1} parent=5 // pred_fallthru
        _
      %p323 = scmp.le.s32.totalorder 1, %s20
      %p324 = scmp.lt.s32.totalorder %s20, 5
      %p325 = pnand %p323, %p324
      %p326 = pneg %p325
      // Predicated region
      $region41: #{tpu_custom_call.1} parent=5 // pred_check
        _
      $region42: #{tpu_custom_call.1} parent=5 // pred_check_branch
        %328 = sbr.rel (%p325) target = $region44
      $region43: #{tpu_custom_call.1} parent=5 // pred_region
        %s329 = ssub.s32 %s20, 1
        %s330 = sand.u32 %s25, 1
        %s331 = scalar_lea.sflag [#allocation4], %s330
        %s332 = sand.u32 %s45, 1
        %s333 = smul.addr %s332, 8
        %s334 = scalar_lea.vmem [#allocation3], %s333
        // Predicated region
        $region45: #{tpu_custom_call.1} parent=43 // pred_check
          %p335 = pneg %p58
        $region46: #{tpu_custom_call.1} parent=43 // pred_check_branch
          %337 = sbr.rel (%p335) target = $region48
        $region47: #{tpu_custom_call.1} parent=43 // pred_region
          %339 = dma.done %s331, 128
        $region48: #{tpu_custom_call.1} parent=43 // pred_fallthru
          _
        // Predicated region
        $region49: #{tpu_custom_call.1} parent=43 // pred_check
          %p340 = pneg %p79
        $region50: #{tpu_custom_call.1} parent=43 // pred_check_branch
          %342 = sbr.rel (%p340) target = $region52
        $region51: #{tpu_custom_call.1} parent=43 // pred_region
          %344 = dma.done [#allocation7], 256
        $region52: #{tpu_custom_call.1} parent=43 // pred_fallthru
          _
        // Predicated region
        $region53: #{tpu_custom_call.1} parent=43 // pred_check
          %p345 = pneg %p100
        $region54: #{tpu_custom_call.1} parent=43 // pred_check_branch
          %347 = sbr.rel (%p345) target = $region56
        $region55: #{tpu_custom_call.1} parent=43 // pred_region
          %349 = dma.done [#allocation7], 128
        $region56: #{tpu_custom_call.1} parent=43 // pred_fallthru
          _
        // Predicated region
        $region57: #{tpu_custom_call.1} parent=43 // pred_check
          %p350 = pneg %p121
        $region58: #{tpu_custom_call.1} parent=43 // pred_check_branch
          %352 = sbr.rel (%p350) target = $region60
        $region59: #{tpu_custom_call.1} parent=43 // pred_region
          %354 = dma.done [#allocation10], 256
        $region60: #{tpu_custom_call.1} parent=43 // pred_fallthru
          _
        %s355 = sand.u32 %s25, 1
        %s356 = scalar_lea.sflag [#allocation4], %s355
        %s357 = sand.u32 %s134, 1
        %s358 = smul.addr %s357, 128
        %s359 = scalar_lea.vmem [#allocation11], %s358
        // Predicated region
        $region61: #{tpu_custom_call.1} parent=43 // pred_check
          %p360 = pneg %p147
        $region62: #{tpu_custom_call.1} parent=43 // pred_check_branch
          %362 = sbr.rel (%p360) target = $region64
        $region63: #{tpu_custom_call.1} parent=43 // pred_region
          %364 = dma.done %s356, 2048
        $region64: #{tpu_custom_call.1} parent=43 // pred_fallthru
          _
        %s365 = sand.u32 %s25, 1
        %s366 = scalar_lea.sflag [#allocation4], %s365
        %s367 = sand.u32 %s160, 1
        %s368 = smul.addr %s367, 4
        %s369 = scalar_lea.vmem [#allocation12], %s368
        // Predicated region
        $region65: #{tpu_custom_call.1} parent=43 // pred_check
          %p370 = pneg %p173
        $region66: #{tpu_custom_call.1} parent=43 // pred_check_branch
          %372 = sbr.rel (%p370) target = $region68
        $region67: #{tpu_custom_call.1} parent=43 // pred_region
          %374 = dma.done %s366, 64
        $region68: #{tpu_custom_call.1} parent=43 // pred_fallthru
          _
        %s375 = sand.u32 %s25, 1
        %s376 = scalar_lea.sflag [#allocation4], %s375
        %s377 = sand.u32 %s45, 1
        %s378 = smul.addr %s377, 8
        %s379 = scalar_lea.vmem [#allocation3], %s378
        %p380 = pneg %p58
        %p381 = pneg %p55
        %p382 = pneg %p79
        %p383 = pneg %p76
        %p384 = pneg %p100
        %p385 = pneg %p97
        %p386 = pneg %p121
        %p387 = pneg %p118
        %s388 = sand.u32 %s25, 1
        %s389 = scalar_lea.sflag [#allocation4], %s388
        %s390 = sand.u32 %s134, 1
        %s391 = smul.addr %s390, 128
        %s392 = scalar_lea.vmem [#allocation11], %s391
        %p393 = pneg %p147
        %p394 = pneg %p144
        %s395 = sand.u32 %s25, 1
        %s396 = scalar_lea.sflag [#allocation4], %s395
        %s397 = sand.u32 %s160, 1
        %s398 = smul.addr %s397, 4
        %s399 = scalar_lea.vmem [#allocation12], %s398
        %p400 = pneg %p173
        %p401 = pneg %p170
        %p402 = pneg %p201
        %p403 = pneg %p198
        %s404 = sand.u32 %s188, 1
        %s405 = scalar_lea.sflag [#allocation5], %s404
        %s406 = sand.u32 %s188, 1
        %s407 = smul.addr %s406, 64
        %s408 = scalar_lea.vmem [#allocation13], %s407
        %s409 = smul.u32 2, %s29
        %s410 = smul.u32 4, %s30
        %s411 = smul.u32 4, %s30
        %s412 = smul.u32 2, %s29
        %s413 = smul.u32 4, %s30
        %p415 = scmp.eq.s32.totalorder %s30, 0
        // Predicated region
        $region69: #{tpu_custom_call.1} parent=43 // pred_check
          %p416 = pneg %p415
        $region70: #{tpu_custom_call.1} parent=43 // pred_check_branch
          %418 = sbr.rel (%p416) target = $region72
        $region71: #{tpu_custom_call.1} parent=43 // pred_region
          %v419 = vld [vmem:[#allocation8] sm:$0xff]
          %v420 = vld [vmem:[%s334] sm:$0xf]
          %v421 = vld [vmem:[%s334 + $0x4] sm:$0xf]
          %v422 = vld [vmem:[#allocation6] sm:$0xf]
          %v423 = vld [vmem:[#allocation6 + $0x4] sm:$0xf]
          %v424 = vld [vmem:[#allocation6 + $0x8] sm:$0xf]
          %v425 = vld [vmem:[#allocation6 + $0xc] sm:$0xf]
          %v426 = vperm.slane %v419, 0
          %v429 = vunpack.c.l.b16 %v420
          %v430 = vunpack.c.l.b16 %v421
          %v431 = vpack.c.b16 %v430, %v429
          %v436 = vunpack.c.l.b16 %v422
          %v437 = vunpack.c.l.b16 %v423
          %v438 = vunpack.c.l.b16 %v424
          %v439 = vunpack.c.l.b16 %v425
          %v440 = vpack.c.b16 %v437, %v436
          %v441 = vpack.c.b16 %v439, %v438
          %vm444 = vcmask 261120
          %v446 = vsel %vm444, %v431, 0
          %448 = vmatpush.bf16.msra.mxu0 0
          %449 = vmatpush.bf16.msra.mxu0 0
          %450 = vmatpush.bf16.msra.mxu0 0
          %451 = vmatpush.bf16.msra.mxu0 0
          %452 = vmatpush.bf16.msra.mxu0 0
          %453 = vmatpush.bf16.msra.mxu0 0
          %454 = vmatpush.bf16.msra.mxu0 %v441
          %455 = vmatpush.bf16.msra.mxu0 %v440
          %456 = vmatmul.bf16.gmra.mxu0 %v446
          %v457 = vpop.f32.mrf.mxu0
          %v458 = vadd.f32 %v426, %v457
          %v459 = vpop.f32.mrf.mxu0
          %v460 = vadd.f32 %v426, %v459
          %461 = vdwg.mxu0
          %v462 = vmul.f32 %v458, 0.5
          %v463 = vmul.f32 %v460, 0.5
          %v464 = vmul.f32 %v458, 0.70710677
          %v465 = vmul.f32 %v460, 0.70710677
          %v466 = vmul.f32 %v464, %v464
          %v467 = vmin.f32 16.0, %v466
          %v468 = vmul.f32 %v467, 2.1237322e-06
          %v469 = vadd.f32 %v468, 0.00028619796
          %v470 = vmul.f32 %v467, %v469
          %v471 = vadd.f32 %v470, 0.0036580483
          %v472 = vmul.f32 %v467, %v471
          %v473 = vadd.f32 %v472, 0.05243302
          %v474 = vmul.f32 %v467, %v473
          %v475 = vadd.f32 %v474, 0.18741608
          %v476 = vmul.f32 %v467, %v475
          %v477 = vadd.f32 %v476, 1.1283791
          %v478 = vmul.f32 %v464, %v477
          %v479 = vmul.f32 %v467, 3.8918573e-05
          %v480 = vadd.f32 %v479, 0.001143296
          %v481 = vmul.f32 %v467, %v480
          %v482 = vadd.f32 %v481, 0.014752088
          %v483 = vmul.f32 %v467, %v482
          %v484 = vadd.f32 %v483, 0.112945676
          %v485 = vmul.f32 %v467, %v484
          %v486 = vadd.f32 %v485, 0.4994258
          %v487 = vmul.f32 %v467, %v486
          %v488 = vadd.f32 %v487, 1.0
          %v489 = vrcp.pop %v488
          %v490 = vmul.f32 %v488, %v489
          %v491 = vsub.f32 1.0, %v490
          %v492 = vmul.f32 %v489, %v491
          %v493 = vadd.f32 %v489, %v492
          %vm494 = vweird.f32 %v488
          %vm495 = vweird.f32 %v489
          %vm496 = vmor %vm494, %vm495
          %v497 = vsel %vm496, %v489, %v493
          %v498 = vand.u32 2147483647, %v488
          %vm499 = vcmp.eq.f32.partialorder %v498, 8.507059e+37
          %v500 = vand.u32 %v488, 2147483648
          %v501 = vor.u32 1.1754944e-38, %v500
          %v502 = vsel %vm499, %v501, %v497
          %v503 = vmul.f32 %v478, %v502
          %v504 = vmin.f32 %v503, 1.0
          %v505 = vmax.f32 %v504, -1.0
          %v506 = vmul.f32 %v465, %v465
          %v507 = vmin.f32 16.0, %v506
          %v508 = vmul.f32 %v507, 2.1237322e-06
          %v509 = vadd.f32 %v508, 0.00028619796
          %v510 = vmul.f32 %v507, %v509
          %v511 = vadd.f32 %v510, 0.0036580483
          %v512 = vmul.f32 %v507, %v511
          %v513 = vadd.f32 %v512, 0.05243302
          %v514 = vmul.f32 %v507, %v513
          %v515 = vadd.f32 %v514, 0.18741608
          %v516 = vmul.f32 %v507, %v515
          %v517 = vadd.f32 %v516, 1.1283791
          %v518 = vmul.f32 %v465, %v517
          %v519 = vmul.f32 %v507, 3.8918573e-05
          %v520 = vadd.f32 %v519, 0.001143296
          %v521 = vmul.f32 %v507, %v520
          %v522 = vadd.f32 %v521, 0.014752088
          %v523 = vmul.f32 %v507, %v522
          %v524 = vadd.f32 %v523, 0.112945676
          %v525 = vmul.f32 %v507, %v524
          %v526 = vadd.f32 %v525, 0.4994258
          %v527 = vmul.f32 %v507, %v526
          %v528 = vadd.f32 %v527, 1.0
          %v529 = vrcp.pop %v528
          %v530 = vmul.f32 %v528, %v529
          %v531 = vsub.f32 1.0, %v530
          %v532 = vmul.f32 %v529, %v531
          %v533 = vadd.f32 %v529, %v532
          %vm534 = vweird.f32 %v528
          %vm535 = vweird.f32 %v529
          %vm536 = vmor %vm534, %vm535
          %v537 = vsel %vm536, %v529, %v533
          %v538 = vand.u32 2147483647, %v528
          %vm539 = vcmp.eq.f32.partialorder %v538, 8.507059e+37
          %v540 = vand.u32 %v528, 2147483648
          %v541 = vor.u32 1.1754944e-38, %v540
          %v542 = vsel %vm539, %v541, %v537
          %v543 = vmul.f32 %v518, %v542
          %v544 = vmin.f32 %v543, 1.0
          %v545 = vmax.f32 %v544, -1.0
          %v546 = vadd.f32 %v505, 1.0
          %v547 = vadd.f32 %v545, 1.0
          %v548 = vmul.f32 %v462, %v546
          %v549 = vmul.f32 %v463, %v547
          %v550 = vsel %vm444, %v548, 0.0
          %551 = vadd.xlane.f32.xlu0 %v550
          %v552 = vpop.xlane.xlu0 %551
          %v553 = vsel %vm444, %v549, 0.0
          %554 = vadd.xlane.f32.xlu0 %v553
          %v555 = vpop.xlane.xlu0 %554
          %v556 = vrcp.pop 32.0
          %v557 = vmul.f32 32.0, %v556
          %v558 = vsub.f32 1.0, %v557
          %v559 = vmul.f32 %v556, %v558
          %v560 = vadd.f32 %v556, %v559
          %vm561 = vweird.f32 %v556
          %v562 = vsel %vm561, %v556, %v560
          %v563 = vmul.f32 %v552, %v562
          %v564 = vmul.f32 %v555, %v562
          %v565 = vsub.f32 %v548, %v563
          %v566 = vsub.f32 %v549, %v564
          %v567 = vmul.f32 %v565, %v565
          %v568 = vmul.f32 %v566, %v566
          %v569 = vsel %vm444, %v567, 0.0
          %570 = vadd.xlane.f32.xlu0 %v569
          %v571 = vpop.xlane.xlu0 %570
          %v572 = vsel %vm444, %v568, 0.0
          %573 = vadd.xlane.f32.xlu0 %v572
          %v574 = vpop.xlane.xlu0 %573
          %v575 = vmul.f32 %v571, %v562
          %v576 = vmul.f32 %v574, %v562
          %v577 = vadd.f32 %v575, 1e-12
          %v578 = vadd.f32 %v576, 1e-12
          %v579 = vrsqrt.pop %v577
          %v580 = vmul.f32 %v579, %v577
          %v581 = vmul.f32 %v580, %v579
          %v582 = vmul.f32 0.5, %v581
          %v583 = vsub.f32 1.5, %v582
          %v584 = vmul.f32 %v579, %v583
          %vm585 = vweird.f32 %v577
          %vm586 = vweird.f32 %v579
          %vm587 = vmor %vm585, %vm586
          %v588 = vsel %vm587, %v579, %v584
          %v589 = vrsqrt.pop %v578
          %v590 = vmul.f32 %v589, %v578
          %v591 = vmul.f32 %v590, %v589
          %v592 = vmul.f32 0.5, %v591
          %v593 = vsub.f32 1.5, %v592
          %v594 = vmul.f32 %v589, %v593
          %vm595 = vweird.f32 %v578
          %vm596 = vweird.f32 %v589
          %vm597 = vmor %vm595, %vm596
          %v598 = vsel %vm597, %v589, %v594
          %v599 = vmul.f32 %v565, %v588
          %v600 = vmul.f32 %v566, %v598
          %v601 = vperm.slane %v419, 1
          %v602 = vmul.f32 %v599, %v601
          %v603 = vmul.f32 %v600, %v601
          %v604 = vperm.slane %v419, 2
          %v605 = vadd.f32 %v602, %v604
          %v606 = vadd.f32 %v603, %v604
          %v607 = vpack.c.bf16 %v606, %v605
          %v608 = vld [vmem:[#allocation9] sm:$0xf]
          %v609 = vld [vmem:[#allocation9 + $0x4] sm:$0xf]
          %v610 = vld [vmem:[#allocation9 + $0x8] sm:$0xf]
          %v611 = vld [vmem:[#allocation9 + $0xc] sm:$0xf]
          %v616 = vunpack.c.l.b16 %v608
          %v617 = vunpack.c.l.b16 %v609
          %v618 = vunpack.c.l.b16 %v610
          %v619 = vunpack.c.l.b16 %v611
          %v620 = vpack.c.b16 %v617, %v616
          %v621 = vpack.c.b16 %v619, %v618
          %v625 = vsel %vm444, %v607, 0
          %627 = vmatpush.bf16.msra.mxu0 0
          %628 = vmatpush.bf16.msra.mxu0 0
          %629 = vmatpush.bf16.msra.mxu0 0
          %630 = vmatpush.bf16.msra.mxu0 0
          %631 = vmatpush.bf16.msra.mxu0 0
          %632 = vmatpush.bf16.msra.mxu0 0
          %633 = vmatpush.bf16.msra.mxu0 %v621
          %634 = vmatpush.bf16.msra.mxu0 %v620
          %635 = vmatmul.bf16.gmra.mxu0 %v625
          %v636 = vpop.f32.mrf.mxu0
          %v637 = vadd.f32 0.0, %v636
          %v638 = vpop.f32.mrf.mxu0
          %v639 = vadd.f32 0.0, %v638
          %640 = vdwg.mxu0
          %v641 = vpack.c.bf16 %v637, %v637
          %v642 = vpack.c.bf16 %v639, %v639
          %vm643 = vcmask 519168
          %644 = vst.msk [vmem:[#allocation2] sm:$0xf] %vm643, %v641
          %645 = vst.msk [vmem:[#allocation2 + $0x4] sm:$0xf] %vm643, %v642
        $region72: #{tpu_custom_call.1} parent=43 // pred_fallthru
          _
        %v646 = vld [vmem:[#allocation2] sm:$0xf]
        %v647 = vld [vmem:[#allocation2 + $0x4] sm:$0xf]
        %v648 = vld [vmem:[%s359] sm:$0xff]
        %v649 = vld [vmem:[%s359 + $0x8] sm:$0xff]
        %v650 = vld [vmem:[%s359 + $0x10] sm:$0xff]
        %v651 = vld [vmem:[%s359 + $0x18] sm:$0xff]
        %v652 = vld [vmem:[%s359 + $0x20] sm:$0xff]
        %v653 = vld [vmem:[%s359 + $0x28] sm:$0xff]
        %v654 = vld [vmem:[%s359 + $0x30] sm:$0xff]
        %v655 = vld [vmem:[%s359 + $0x38] sm:$0xff]
        %v656 = vld [vmem:[%s359 + $0x40] sm:$0xff]
        %v657 = vld [vmem:[%s359 + $0x48] sm:$0xff]
        %v658 = vld [vmem:[%s359 + $0x50] sm:$0xff]
        %v659 = vld [vmem:[%s359 + $0x58] sm:$0xff]
        %v660 = vld [vmem:[%s359 + $0x60] sm:$0xff]
        %v661 = vld [vmem:[%s359 + $0x68] sm:$0xff]
        %v662 = vld [vmem:[%s359 + $0x70] sm:$0xff]
        %v663 = vld [vmem:[%s359 + $0x78] sm:$0xff]
        %v664 = vld [vmem:[%s369] sm:$0xf]
        %v666 = vperm.slane %v664, 0
        %v667 = vperm.slane %v664, 1
        %v668 = vperm.slane %v664, 2
        %v669 = vperm.slane %v664, 3
        %v676 = vunpack.c.l.b16 %v646
        %v677 = vunpack.c.l.b16 %v647
        %v678 = vpack.c.b16 %v677, %v676
        %v695 = vunpack.c.l.b16 %v648
        %v696 = vunpack.c.h.b16 %v648
        %v697 = vunpack.c.l.b16 %v649
        %v698 = vunpack.c.h.b16 %v649
        %v699 = vunpack.c.l.b16 %v650
        %v700 = vunpack.c.h.b16 %v650
        %v701 = vunpack.c.l.b16 %v651
        %v702 = vunpack.c.h.b16 %v651
        %v703 = vunpack.c.l.b16 %v652
        %v704 = vunpack.c.h.b16 %v652
        %v705 = vunpack.c.l.b16 %v653
        %v706 = vunpack.c.h.b16 %v653
        %v707 = vunpack.c.l.b16 %v654
        %v708 = vunpack.c.h.b16 %v654
        %v709 = vunpack.c.l.b16 %v655
        %v710 = vunpack.c.h.b16 %v655
        %v711 = vunpack.c.l.b16 %v656
        %v712 = vunpack.c.h.b16 %v656
        %v713 = vunpack.c.l.b16 %v657
        %v714 = vunpack.c.h.b16 %v657
        %v715 = vunpack.c.l.b16 %v658
        %v716 = vunpack.c.h.b16 %v658
        %v717 = vunpack.c.l.b16 %v659
        %v718 = vunpack.c.h.b16 %v659
        %v719 = vunpack.c.l.b16 %v660
        %v720 = vunpack.c.h.b16 %v660
        %v721 = vunpack.c.l.b16 %v661
        %v722 = vunpack.c.h.b16 %v661
        %v723 = vunpack.c.l.b16 %v662
        %v724 = vunpack.c.h.b16 %v662
        %v725 = vunpack.c.l.b16 %v663
        %v726 = vunpack.c.h.b16 %v663
        %v727 = vpack.c.b16 %v699, %v695
        %v728 = vpack.c.b16 %v700, %v696
        %v729 = vpack.c.b16 %v701, %v697
        %v730 = vpack.c.b16 %v702, %v698
        %v731 = vpack.c.b16 %v707, %v703
        %v732 = vpack.c.b16 %v708, %v704
        %v733 = vpack.c.b16 %v709, %v705
        %v734 = vpack.c.b16 %v710, %v706
        %v735 = vpack.c.b16 %v715, %v711
        %v736 = vpack.c.b16 %v716, %v712
        %v737 = vpack.c.b16 %v717, %v713
        %v738 = vpack.c.b16 %v718, %v714
        %v739 = vpack.c.b16 %v723, %v719
        %v740 = vpack.c.b16 %v724, %v720
        %v741 = vpack.c.b16 %v725, %v721
        %v742 = vpack.c.b16 %v726, %v722
        %vm759 = vcmask 523264
        %v761 = vsel %vm759, %v678, 0
        %763 = vmatpush.bf16.msra.mxu0 0
        %764 = vmatpush.bf16.msra.mxu0 0
        %765 = vmatpush.bf16.msra.mxu0 0
        %766 = vmatpush.bf16.msra.mxu0 0
        %767 = vmatpush.bf16.msra.mxu0 %v739
        %768 = vmatpush.bf16.msra.mxu0 %v735
        %769 = vmatpush.bf16.msra.mxu0 %v731
        %770 = vmatpush.bf16.msra.mxu0 %v727
        %771 = vmatmul.bf16.gmra.mxu0 %v761
        %v772 = vpop.f32.mrf.mxu0
        %v773 = vadd.f32 %v666, %v772
        %v774 = vpop.f32.mrf.mxu0
        %v775 = vadd.f32 %v666, %v774
        %776 = vdwg.mxu0
        %777 = vmatpush.bf16.msra.mxu0 0
        %778 = vmatpush.bf16.msra.mxu0 0
        %779 = vmatpush.bf16.msra.mxu0 0
        %780 = vmatpush.bf16.msra.mxu0 0
        %781 = vmatpush.bf16.msra.mxu0 %v740
        %782 = vmatpush.bf16.msra.mxu0 %v736
        %783 = vmatpush.bf16.msra.mxu0 %v732
        %784 = vmatpush.bf16.msra.mxu0 %v728
        %785 = vmatmul.bf16.gmra.mxu0 %v761
        %v786 = vpop.f32.mrf.mxu0
        %v787 = vadd.f32 %v667, %v786
        %v788 = vpop.f32.mrf.mxu0
        %v789 = vadd.f32 %v667, %v788
        %790 = vdwg.mxu0
        %791 = vmatpush.bf16.msra.mxu0 0
        %792 = vmatpush.bf16.msra.mxu0 0
        %793 = vmatpush.bf16.msra.mxu0 0
        %794 = vmatpush.bf16.msra.mxu0 0
        %795 = vmatpush.bf16.msra.mxu0 %v741
        %796 = vmatpush.bf16.msra.mxu0 %v737
        %797 = vmatpush.bf16.msra.mxu0 %v733
        %798 = vmatpush.bf16.msra.mxu0 %v729
        %799 = vmatmul.bf16.gmra.mxu0 %v761
        %v800 = vpop.f32.mrf.mxu0
        %v801 = vadd.f32 %v668, %v800
        %v802 = vpop.f32.mrf.mxu0
        %v803 = vadd.f32 %v668, %v802
        %804 = vdwg.mxu0
        %805 = vmatpush.bf16.msra.mxu0 0
        %806 = vmatpush.bf16.msra.mxu0 0
        %807 = vmatpush.bf16.msra.mxu0 0
        %808 = vmatpush.bf16.msra.mxu0 0
        %809 = vmatpush.bf16.msra.mxu0 %v742
        %810 = vmatpush.bf16.msra.mxu0 %v738
        %811 = vmatpush.bf16.msra.mxu0 %v734
        %812 = vmatpush.bf16.msra.mxu0 %v730
        %813 = vmatmul.bf16.gmra.mxu0 %v761
        %v814 = vpop.f32.mrf.mxu0
        %v815 = vadd.f32 %v669, %v814
        %v816 = vpop.f32.mrf.mxu0
        %v817 = vadd.f32 %v669, %v816
        %818 = vdwg.mxu0
        %819 = vst [vmem:[%s408] sm:$0xff] %v773
        %820 = vst [vmem:[%s408 + $0x8] sm:$0xff] %v787
        %821 = vst [vmem:[%s408 + $0x10] sm:$0xff] %v801
        %822 = vst [vmem:[%s408 + $0x18] sm:$0xff] %v815
        %823 = vst [vmem:[%s408 + $0x20] sm:$0xff] %v775
        %824 = vst [vmem:[%s408 + $0x28] sm:$0xff] %v789
        %825 = vst [vmem:[%s408 + $0x30] sm:$0xff] %v803
        %826 = vst [vmem:[%s408 + $0x38] sm:$0xff] %v817
        %s827 = sand.u32 %s188, 1
        %s828 = scalar_lea.sflag [#allocation5], %s827
        %s829 = sand.u32 %s188, 1
        %s830 = smul.addr %s829, 64
        %s831 = scalar_lea.vmem [#allocation13], %s830
        // Predicated region
        $region73: #{tpu_custom_call.1} parent=43 // pred_check
          %p832 = pneg %p198
        $region74: #{tpu_custom_call.1} parent=43 // pred_check_branch
          %834 = sbr.rel (%p832) target = $region76
        $region75: #{tpu_custom_call.1} parent=43 // pred_region
          %s835 = smul.u32 2, %s29
          %s836 = smul.u32 4, %s30
          %838 = vsyncadd %s828, 0
          %s839 = smul.addr %s835, 8
          %s840 = sadd.s32 %s836, %s839
          %s841 = smul.addr %s840, 8
          %s842 = scalar_lea.hbm %s6, %s841
          %s843 = sshll.u32 %s831, 4
          %s844 = int_to_ptr.vmem [resolvable:$true] %s843
          %s845 = sshll.u32 %s842, 4
          %s846 = int_to_ptr.hbm [resolvable:$true] %s845
          %851 = dma.vmem_to_hbm [thread:$0]  %s844, 1024, %s846, %s828, 512, 1024, 32
        $region76: #{tpu_custom_call.1} parent=43 // pred_fallthru
          _
      $region44: #{tpu_custom_call.1} parent=5 // pred_fallthru
        _
      %p852 = scmp.le.s32.totalorder 2, %s20
      // Predicated region
      $region77: #{tpu_custom_call.1} parent=5 // pred_check
        %p853 = pneg %p852
      $region78: #{tpu_custom_call.1} parent=5 // pred_check_branch
        %855 = sbr.rel (%p853) target = $region80
      $region79: #{tpu_custom_call.1} parent=5 // pred_region
        %s856 = ssub.s32 %s20, 2
        // Predicated region
        $region81: #{tpu_custom_call.1} parent=79 // pred_check
          %p857 = pneg %p204
        $region82: #{tpu_custom_call.1} parent=79 // pred_check_branch
          %859 = sbr.rel (%p857) target = $region84
        $region83: #{tpu_custom_call.1} parent=79 // pred_region
          %s860 = sand.u32 %s189, 1
          %s861 = scalar_lea.sflag [#allocation5], %s860
          %s862 = sand.u32 %s189, 1
          %s863 = smul.addr %s862, 64
          %s864 = scalar_lea.vmem [#allocation13], %s863
          %866 = dma.done %s861, 1024
        $region84: #{tpu_custom_call.1} parent=79 // pred_fallthru
          _
      $region80: #{tpu_custom_call.1} parent=5 // pred_fallthru
        _
    $region6: #{tpu_custom_call.1} parent=1 // loop_footer
      %s24 = sadd.s32 1, %s20
    $region7: #{tpu_custom_call.1} parent=1 // loop_footer_branch
      %19 = sbr.rel target = $region3
    $region8: #{tpu_custom_call.1} parent=1 // loop_exit
      _
    %867 = vsyncpa [#allocation4], 1
    %s868 = scalar_lea.sflag [#allocation4], 1
    %869 = vsyncpa %s868, 1
    %870 = vsyncpa [#allocation7], 1
    %871 = vsyncpa [#allocation10], 1
    %872 = vsyncpa [#allocation5], 1
    %s873 = scalar_lea.sflag [#allocation5], 1
    %874 = vsyncpa %s873, 1

// kernel: tpu_custom_call.1
$region0: #{tpu_custom_call.1}
  #allocation0 [shape = 'u32[]', space=smem, size = 0x4, offset = 0x4, fixed_abs, tag = 'smem constant byte address 0x4 - core index']
  #allocation1 [shape = 'u32[72,128]{1,0:T(1,128)}', space=vmem, size = 0x9000, scoped, tag = 'internal scratch']
  #allocation2 [shape = 'bf16[16,64]{1,0:T(8,128)(2,1)}', space=vmem, size = 0x1000, scoped, tag = 'scratch operand']
  %s0 = inlined_call_operand.hbm [shape: bf16[32,32], index: 0, kind: input, shape index: {}]
  %s1 = inlined_call_operand.hbm [shape: bf16[32,32], index: 1, kind: input, shape index: {}]
  %s2 = inlined_call_operand.hbm [shape: f32[8,32], index: 2, kind: input, shape index: {}]
  %s3 = inlined_call_operand.hbm [shape: bf16[32,64], index: 3, kind: input, shape index: {}]
  %s4 = inlined_call_operand.hbm [shape: bf16[64,1024], index: 4, kind: input, shape index: {}]
  %s5 = inlined_call_operand.hbm [shape: f32[1,1024], index: 5, kind: input, shape index: {}]
  %s6 = inlined_call_operand.hbm [shape: f32[32,1024], index: 6, kind: output, shape index: {}]
  %s7 = sld [smem:[#allocation0]]
  $region85: #{tpu_custom_call.1} parent=0
    _
  %s9 = ssub.s32 1, %s7
  %s10 = scalar_select 0, %s9, %s7
  $region1: #{tpu_custom_call.1} parent=0
    #allocation3 [shape = 'u8[8192]{0}', space=vmem, size = 0x2000, scoped, tag = 'input window, operand 0']
    #allocation4 [shape = 's32[2]{0}', space=sflag, size = 0x8, scoped, tag = 'scoped memory for tpu_custom_call.1']
    #allocation5 [shape = 's32[2]{0}', space=sflag, size = 0x8, scoped, tag = 'scoped memory for tpu_custom_call.1']
    #allocation6 [shape = 'u8[8192]{0}', space=vmem, size = 0x2000, scoped, tag = 'input window, operand 1, single buffered']
    #allocation7 [shape = 's32[1]{0}', space=sflag, size = 0x4, scoped, tag = 'scoped memory for tpu_custom_call.1']
    #allocation8 [shape = 'u8[4096]{0}', space=vmem, size = 0x1000, scoped, tag = 'input window, operand 2, single buffered']
    #allocation9 [shape = 'u8[8192]{0}', space=vmem, size = 0x2000, scoped, tag = 'input window, operand 3, single buffered']
    #allocation10 [shape = 's32[1]{0}', space=sflag, size = 0x4, scoped, tag = 'scoped memory for tpu_custom_call.1']
    #allocation11 [shape = 'u8[131072]{0}', space=vmem, size = 0x20000, scoped, tag = 'input window, operand 4']
    #allocation12 [shape = 'u8[4096]{0}', space=vmem, size = 0x1000, scoped, tag = 'input window, operand 5']
    #allocation13 [shape = 'u8[65536]{0}', space=vmem, size = 0x10000, scoped, tag = 'output window, operand 0']
    %11 = vsyncpa [#allocation4], 0
    %s12 = scalar_lea.sflag [#allocation4], 1
    %13 = vsyncpa %s12, 0
    %14 = vsyncpa [#allocation7], 0
    %15 = vsyncpa [#allocation10], 0
    %16 = vsyncpa [#allocation5], 0
    %s17 = scalar_lea.sflag [#allocation5], 1
    %18 = vsyncpa %s17, 0
    loop: start=0, step=1, limit=6
    $region2: #{tpu_custom_call.1} parent=1 // loop_pre_header
      _
    $region3: #{tpu_custom_call.1} parent=1 // loop_header
      %s20 = sphi 0, %s24
      %p21 = scmp.ge.s32.totalorder %s20, 6
      %s27 = sphi 0, %s39
      %s28 = sphi 0, %s35
      %s29 = sphi 0, %s27
      %s30 = sphi 0, %s28
      %s31 = sphi 0, %s29
      %s32 = sphi 0, %s30
      %s42 = sphi 0, %s44
      %s45 = sphi 0, %s42
      %s46 = sphi 0, %s45
      %s62 = sphi 0, %s46
      %s66 = sphi 0, %s66
      %s68 = sphi 0, %s66
      %s69 = sphi 0, %s68
      %s83 = sphi 0, %s69
      %s87 = sphi 0, %s87
      %s89 = sphi 0, %s87
      %s90 = sphi 0, %s89
      %s104 = sphi 0, %s90
      %s108 = sphi 0, %s108
      %s110 = sphi 0, %s108
      %s111 = sphi 0, %s110
      %s125 = sphi 0, %s111
      %s131 = sphi 0, %s133
      %s134 = sphi 0, %s131
      %s135 = sphi 0, %s134
      %s151 = sphi 0, %s135
      %s157 = sphi 0, %s159
      %s160 = sphi 0, %s157
      %s161 = sphi 0, %s160
      %s177 = sphi 0, %s161
      %s185 = sphi 0, %s187
      %s188 = sphi 0, %s185
      %s189 = sphi 0, %s188
      %s205 = sphi 0, %s189
    $region4: #{tpu_custom_call.1} parent=1 // loop_header_branch
      %23 = sbr.rel (%p21) target = $region8
    $region5: #{tpu_custom_call.1} parent=1 // loop_body
      %s25 = ssub.s32 %s20, 1
      %s26 = ssub.s32 %s20, 2
      %s33 = sadd.s32 1, %s28
      %p34 = scmp.ge.s32.totalorder %s33, 2
      %s35 = scalar_select %p34, 0, %s33
      %s36 = sadd.s32 1, %s27
      %s37 = scalar_select %p34, %s36, %s27
      %p38 = scmp.ge.s32.totalorder %s37, 2
      %s39 = scalar_select %p38, 0, %s37
      %s40 = ssub.s32 %s27, %s39
      %p41 = scmp.eq.s32.totalorder %s40, 0
      %s43 = sadd.s32 %s42, 1
      %s44 = scalar_select %p41, %s42, %s43
      %p47 = pneg %p41
      %p48 = scmp.eq.s32.totalorder %s20, 3
      %p49 = por %p47, %p48
      %p50 = scmp.ne.s32.totalorder %s42, %s45
      %p51 = scmp.eq.s32.totalorder %s20, 0
      %p52 = por %p50, %p51
      %p53 = scmp.ne.s32.totalorder %s42, %s45
      %p54 = scmp.eq.s32.totalorder %s25, 3
      %p55 = por %p53, %p54
      %p56 = scmp.ne.s32.totalorder %s45, %s46
      %p57 = scmp.eq.s32.totalorder %s25, 0
      %p58 = por %p56, %p57
      %p59 = scmp.ne.s32.totalorder %s45, %s46
      %p60 = scmp.eq.s32.totalorder %s26, 3
      %p61 = por %p59, %p60
      %p63 = scmp.ne.s32.totalorder %s46, %s62
      %p64 = scmp.eq.s32.totalorder %s26, 0
      %p65 = por %p63, %p64
      %s67 = sadd.s32 %s66, 1
      %p70 = scmp.eq.s32.totalorder %s20, 3
      %p71 = scmp.ne.s32.totalorder %s66, %s68
      %p72 = scmp.eq.s32.totalorder %s20, 0
      %p73 = por %p71, %p72
      %p74 = scmp.ne.s32.totalorder %s66, %s68
      %p75 = scmp.eq.s32.totalorder %s25, 3
      %p76 = por %p74, %p75
      %p77 = scmp.ne.s32.totalorder %s68, %s69
      %p78 = scmp.eq.s32.totalorder %s25, 0
      %p79 = por %p77, %p78
      %p80 = scmp.ne.s32.totalorder %s68, %s69
      %p81 = scmp.eq.s32.totalorder %s26, 3
      %p82 = por %p80, %p81
      %p84 = scmp.ne.s32.totalorder %s69, %s83
      %p85 = scmp.eq.s32.totalorder %s26, 0
      %p86 = por %p84, %p85
      %s88 = sadd.s32 %s87, 1
      %p91 = scmp.eq.s32.totalorder %s20, 3
      %p92 = scmp.ne.s32.totalorder %s87, %s89
      %p93 = scmp.eq.s32.totalorder %s20, 0
      %p94 = por %p92, %p93
      %p95 = scmp.ne.s32.totalorder %s87, %s89
      %p96 = scmp.eq.s32.totalorder %s25, 3
      %p97 = por %p95, %p96
      %p98 = scmp.ne.s32.totalorder %s89, %s90
      %p99 = scmp.eq.s32.totalorder %s25, 0
      %p100 = por %p98, %p99
      %p101 = scmp.ne.s32.totalorder %s89, %s90
      %p102 = scmp.eq.s32.totalorder %s26, 3
      %p103 = por %p101, %p102
      %p105 = scmp.ne.s32.totalorder %s90, %s104
      %p106 = scmp.eq.s32.totalorder %s26, 0
      %p107 = por %p105, %p106
      %s109 = sadd.s32 %s108, 1
      %p112 = scmp.eq.s32.totalorder %s20, 3
      %p113 = scmp.ne.s32.totalorder %s108, %s110
      %p114 = scmp.eq.s32.totalorder %s20, 0
      %p115 = por %p113, %p114
      %p116 = scmp.ne.s32.totalorder %s108, %s110
      %p117 = scmp.eq.s32.totalorder %s25, 3
      %p118 = por %p116, %p117
      %p119 = scmp.ne.s32.totalorder %s110, %s111
      %p120 = scmp.eq.s32.totalorder %s25, 0
      %p121 = por %p119, %p120
      %p122 = scmp.ne.s32.totalorder %s110, %s111
      %p123 = scmp.eq.s32.totalorder %s26, 3
      %p124 = por %p122, %p123
      %p126 = scmp.ne.s32.totalorder %s111, %s125
      %p127 = scmp.eq.s32.totalorder %s26, 0
      %p128 = por %p126, %p127
      %s129 = ssub.s32 %s28, %s35
      %p130 = scmp.eq.s32.totalorder %s129, 0
      %s132 = sadd.s32 %s131, 1
      %s133 = scalar_select %p130, %s131, %s132
      %p136 = pneg %p130
      %p137 = scmp.eq.s32.totalorder %s20, 3
      %p138 = por %p136, %p137
      %p139 = scmp.ne.s32.totalorder %s131, %s134
      %p140 = scmp.eq.s32.totalorder %s20, 0
      %p141 = por %p139, %p140
      %p142 = scmp.ne.s32.totalorder %s131, %s134
      %p143 = scmp.eq.s32.totalorder %s25, 3
      %p144 = por %p142, %p143
      %p145 = scmp.ne.s32.totalorder %s134, %s135
      %p146 = scmp.eq.s32.totalorder %s25, 0
      %p147 = por %p145, %p146
      %p148 = scmp.ne.s32.totalorder %s134, %s135
      %p149 = scmp.eq.s32.totalorder %s26, 3
      %p150 = por %p148, %p149
      %p152 = scmp.ne.s32.totalorder %s135, %s151
      %p153 = scmp.eq.s32.totalorder %s26, 0
      %p154 = por %p152, %p153
      %s155 = ssub.s32 %s28, %s35
      %p156 = scmp.eq.s32.totalorder %s155, 0
      %s158 = sadd.s32 %s157, 1
      %s159 = scalar_select %p156, %s157, %s158
      %p162 = pneg %p156
      %p163 = scmp.eq.s32.totalorder %s20, 3
      %p164 = por %p162, %p163
      %p165 = scmp.ne.s32.totalorder %s157, %s160
      %p166 = scmp.eq.s32.totalorder %s20, 0
      %p167 = por %p165, %p166
      %p168 = scmp.ne.s32.totalorder %s157, %s160
      %p169 = scmp.eq.s32.totalorder %s25, 3
      %p170 = por %p168, %p169
      %p171 = scmp.ne.s32.totalorder %s160, %s161
      %p172 = scmp.eq.s32.totalorder %s25, 0
      %p173 = por %p171, %p172
      %p174 = scmp.ne.s32.totalorder %s160, %s161
      %p175 = scmp.eq.s32.totalorder %s26, 3
      %p176 = por %p174, %p175
      %p178 = scmp.ne.s32.totalorder %s161, %s177
      %p179 = scmp.eq.s32.totalorder %s26, 0
      %p180 = por %p178, %p179
      %s181 = ssub.s32 %s27, %s39
      %s182 = ssub.s32 %s28, %s35
      %s183 = sor.u32 %s181, %s182
      %p184 = scmp.eq.s32.totalorder %s183, 0
      %s186 = sadd.s32 %s185, 1
      %s187 = scalar_select %p184, %s185, %s186
      %p190 = pneg %p184
      %p191 = scmp.eq.s32.totalorder %s20, 3
      %p192 = por %p190, %p191
      %p193 = scmp.ne.s32.totalorder %s185, %s188
      %p194 = scmp.eq.s32.totalorder %s20, 0
      %p195 = por %p193, %p194
      %p196 = scmp.ne.s32.totalorder %s185, %s188
      %p197 = scmp.eq.s32.totalorder %s25, 3
      %p198 = por %p196, %p197
      %p199 = scmp.ne.s32.totalorder %s188, %s189
      %p200 = scmp.eq.s32.totalorder %s25, 0
      %p201 = por %p199, %p200
      %p202 = scmp.ne.s32.totalorder %s188, %s189
      %p203 = scmp.eq.s32.totalorder %s26, 3
      %p204 = por %p202, %p203
      %p206 = scmp.ne.s32.totalorder %s189, %s205
      %p207 = scmp.eq.s32.totalorder %s26, 0
      %p208 = por %p206, %p207
      %p209 = scmp.le.s32.totalorder 1, %s20
      %p210 = scmp.lt.s32.totalorder %s20, 5
      %p211 = pnand %p209, %p210
      %p212 = pneg %p211
      // Predicated region
      $region9: #{tpu_custom_call.1} parent=5 // pred_check
        _
      $region10: #{tpu_custom_call.1} parent=5 // pred_check_branch
        %214 = sbr.rel (%p211) target = $region12
      $region11: #{tpu_custom_call.1} parent=5 // pred_region
        %s215 = ssub.s32 %s20, 1
        // Predicated region
        $region13: #{tpu_custom_call.1} parent=11 // pred_check
          %p216 = pneg %p79
        $region14: #{tpu_custom_call.1} parent=11 // pred_check_branch
          %218 = sbr.rel (%p216) target = $region16
        $region15: #{tpu_custom_call.1} parent=11 // pred_region
          %220 = vsyncadd [#allocation7], 0
          %s221 = sshll.u32 %s1, 4
          %s222 = int_to_ptr.hbm [resolvable:$true] %s221
          %s223 = sshll.u32 [#allocation6], 4
          %s224 = int_to_ptr.vmem [resolvable:$true] %s223
          %229 = dma.hbm_to_vmem [thread:$0]  %s222, 256, %s224, [#allocation7], 64, 64, 4
        $region16: #{tpu_custom_call.1} parent=11 // pred_fallthru
          _
        // Predicated region
        $region17: #{tpu_custom_call.1} parent=11 // pred_check
          %p230 = pneg %p100
        $region18: #{tpu_custom_call.1} parent=11 // pred_check_branch
          %232 = sbr.rel (%p230) target = $region20
        $region19: #{tpu_custom_call.1} parent=11 // pred_region
          %234 = vsyncadd [#allocation7], 0
          %s236 = sshll.u32 %s2, 4
          %s237 = int_to_ptr.hbm [resolvable:$true] %s236
          %s238 = sshll.u32 [#allocation8], 4
          %s239 = int_to_ptr.vmem [resolvable:$true] %s238
          %241 = dma.hbm_to_vmem [thread:$0]  %s237, 128, %s239, [#allocation7]
        $region20: #{tpu_custom_call.1} parent=11 // pred_fallthru
          _
        // Predicated region
        $region21: #{tpu_custom_call.1} parent=11 // pred_check
          %p242 = pneg %p121
        $region22: #{tpu_custom_call.1} parent=11 // pred_check_branch
          %244 = sbr.rel (%p242) target = $region24
        $region23: #{tpu_custom_call.1} parent=11 // pred_region
          %246 = vsyncadd [#allocation10], 0
          %s247 = sshll.u32 %s3, 4
          %s248 = int_to_ptr.hbm [resolvable:$true] %s247
          %s249 = sshll.u32 [#allocation9], 4
          %s250 = int_to_ptr.vmem [resolvable:$true] %s249
          %255 = dma.hbm_to_vmem [thread:$0]  %s248, 256, %s250, [#allocation10], 64, 64, 4
        $region24: #{tpu_custom_call.1} parent=11 // pred_fallthru
          _
      $region12: #{tpu_custom_call.1} parent=5 // pred_fallthru
        _
      %p256 = scmp.lt.s32.totalorder %s20, 4
      // Predicated region
      $region25: #{tpu_custom_call.1} parent=5 // pred_check
        %p257 = pneg %p256
      $region26: #{tpu_custom_call.1} parent=5 // pred_check_branch
        %259 = sbr.rel (%p257) target = $region28
      $region27: #{tpu_custom_call.1} parent=5 // pred_region
        // Predicated region
        $region29: #{tpu_custom_call.1} parent=27 // pred_check
          %p260 = pneg %p52
        $region30: #{tpu_custom_call.1} parent=27 // pred_check_branch
          %262 = sbr.rel (%p260) target = $region32
        $region31: #{tpu_custom_call.1} parent=27 // pred_region
          %s263 = sand.u32 %s20, 1
          %s264 = scalar_lea.sflag [#allocation4], %s263
          %s265 = sand.u32 %s42, 1
          %s266 = smul.addr %s265, 8
          %s267 = scalar_lea.vmem [#allocation3], %s266
          %s268 = smul.u32 2, %s27
          %270 = vsyncadd %s264, 0
          %s271 = smul.addr %s268, 4
          %s272 = scalar_lea.hbm %s0, %s271
          %s273 = sshll.u32 %s272, 4
          %s274 = int_to_ptr.hbm [resolvable:$true] %s273
          %s275 = sshll.u32 %s267, 4
          %s276 = int_to_ptr.vmem [resolvable:$true] %s275
          %281 = dma.hbm_to_vmem [thread:$0]  %s274, 128, %s276, %s264, 64, 64, 4
        $region32: #{tpu_custom_call.1} parent=27 // pred_fallthru
          _
        // Predicated region
        $region33: #{tpu_custom_call.1} parent=27 // pred_check
          %p282 = pneg %p141
        $region34: #{tpu_custom_call.1} parent=27 // pred_check_branch
          %284 = sbr.rel (%p282) target = $region36
        $region35: #{tpu_custom_call.1} parent=27 // pred_region
          %s285 = sand.u32 %s20, 1
          %s286 = scalar_lea.sflag [#allocation4], %s285
          %s287 = sand.u32 %s131, 1
          %s288 = smul.addr %s287, 128
          %s289 = scalar_lea.vmem [#allocation11], %s288
          %s290 = smul.u32 4, %s28
          %292 = vsyncadd %s286, 0
          %s293 = smul.addr %s290, 4
          %s294 = scalar_lea.hbm %s4, %s293
          %s295 = sshll.u32 %s294, 4
          %s296 = int_to_ptr.hbm [resolvable:$true] %s295
          %s297 = sshll.u32 %s289, 4
          %s298 = int_to_ptr.vmem [resolvable:$true] %s297
          %303 = dma.hbm_to_vmem [thread:$0]  %s296, 2048, %s298, %s286, 512, 256, 16
        $region36: #{tpu_custom_call.1} parent=27 // pred_fallthru
          _
        // Predicated region
        $region37: #{tpu_custom_call.1} parent=27 // pred_check
          %p304 = pneg %p167
        $region38: #{tpu_custom_call.1} parent=27 // pred_check_branch
          %306 = sbr.rel (%p304) target = $region40
        $region39: #{tpu_custom_call.1} parent=27 // pred_region
          %s307 = sand.u32 %s20, 1
          %s308 = scalar_lea.sflag [#allocation4], %s307
          %s309 = sand.u32 %s157, 1
          %s310 = smul.addr %s309, 4
          %s311 = scalar_lea.vmem [#allocation12], %s310
          %s312 = smul.u32 4, %s28
          %314 = vsyncadd %s308, 0
          %s315 = scalar_lea.hbm %s5, %s312
          %s317 = sshll.u32 %s315, 4
          %s318 = int_to_ptr.hbm [resolvable:$true] %s317
          %s319 = sshll.u32 %s311, 4
          %s320 = int_to_ptr.vmem [resolvable:$true] %s319
          %322 = dma.hbm_to_vmem [thread:$0]  %s318, 64, %s320, %s308
        $region40: #{tpu_custom_call.1} parent=27 // pred_fallthru
          _
      $region28: #{tpu_custom_call.1} parent=5 // pred_fallthru
        _
      %p323 = scmp.le.s32.totalorder 1, %s20
      %p324 = scmp.lt.s32.totalorder %s20, 5
      %p325 = pnand %p323, %p324
      %p326 = pneg %p325
      // Predicated region
      $region41: #{tpu_custom_call.1} parent=5 // pred_check
        _
      $region42: #{tpu_custom_call.1} parent=5 // pred_check_branch
        %328 = sbr.rel (%p325) target = $region44
      $region43: #{tpu_custom_call.1} parent=5 // pred_region
        %s329 = ssub.s32 %s20, 1
        %s330 = sand.u32 %s25, 1
        %s331 = scalar_lea.sflag [#allocation4], %s330
        %s332 = sand.u32 %s45, 1
        %s333 = smul.addr %s332, 8
        %s334 = scalar_lea.vmem [#allocation3], %s333
        // Predicated region
        $region45: #{tpu_custom_call.1} parent=43 // pred_check
          %p335 = pneg %p58
        $region46: #{tpu_custom_call.1} parent=43 // pred_check_branch
          %337 = sbr.rel (%p335) target = $region48
        $region47: #{tpu_custom_call.1} parent=43 // pred_region
          %339 = dma.done %s331, 128
        $region48: #{tpu_custom_call.1} parent=43 // pred_fallthru
          _
        // Predicated region
        $region49: #{tpu_custom_call.1} parent=43 // pred_check
          %p340 = pneg %p79
        $region50: #{tpu_custom_call.1} parent=43 // pred_check_branch
          %342 = sbr.rel (%p340) target = $region52
        $region51: #{tpu_custom_call.1} parent=43 // pred_region
          %344 = dma.done [#allocation7], 256
        $region52: #{tpu_custom_call.1} parent=43 // pred_fallthru
          _
        // Predicated region
        $region53: #{tpu_custom_call.1} parent=43 // pred_check
          %p345 = pneg %p100
        $region54: #{tpu_custom_call.1} parent=43 // pred_check_branch
          %347 = sbr.rel (%p345) target = $region56
        $region55: #{tpu_custom_call.1} parent=43 // pred_region
          %349 = dma.done [#allocation7], 128
        $region56: #{tpu_custom_call.1} parent=43 // pred_fallthru
          _
        // Predicated region
        $region57: #{tpu_custom_call.1} parent=43 // pred_check
          %p350 = pneg %p121
        $region58: #{tpu_custom_call.1} parent=43 // pred_check_branch
          %352 = sbr.rel (%p350) target = $region60
        $region59: #{tpu_custom_call.1} parent=43 // pred_region
          %354 = dma.done [#allocation10], 256
        $region60: #{tpu_custom_call.1} parent=43 // pred_fallthru
          _
        %s355 = sand.u32 %s25, 1
        %s356 = scalar_lea.sflag [#allocation4], %s355
        %s357 = sand.u32 %s134, 1
        %s358 = smul.addr %s357, 128
        %s359 = scalar_lea.vmem [#allocation11], %s358
        // Predicated region
        $region61: #{tpu_custom_call.1} parent=43 // pred_check
          %p360 = pneg %p147
        $region62: #{tpu_custom_call.1} parent=43 // pred_check_branch
          %362 = sbr.rel (%p360) target = $region64
        $region63: #{tpu_custom_call.1} parent=43 // pred_region
          %364 = dma.done %s356, 2048
        $region64: #{tpu_custom_call.1} parent=43 // pred_fallthru
          _
        %s365 = sand.u32 %s25, 1
        %s366 = scalar_lea.sflag [#allocation4], %s365
        %s367 = sand.u32 %s160, 1
        %s368 = smul.addr %s367, 4
        %s369 = scalar_lea.vmem [#allocation12], %s368
        // Predicated region
        $region65: #{tpu_custom_call.1} parent=43 // pred_check
          %p370 = pneg %p173
        $region66: #{tpu_custom_call.1} parent=43 // pred_check_branch
          %372 = sbr.rel (%p370) target = $region68
        $region67: #{tpu_custom_call.1} parent=43 // pred_region
          %374 = dma.done %s366, 64
        $region68: #{tpu_custom_call.1} parent=43 // pred_fallthru
          _
        %s375 = sand.u32 %s25, 1
        %s376 = scalar_lea.sflag [#allocation4], %s375
        %s377 = sand.u32 %s45, 1
        %s378 = smul.addr %s377, 8
        %s379 = scalar_lea.vmem [#allocation3], %s378
        %p380 = pneg %p58
        %p381 = pneg %p55
        %p382 = pneg %p79
        %p383 = pneg %p76
        %p384 = pneg %p100
        %p385 = pneg %p97
        %p386 = pneg %p121
        %p387 = pneg %p118
        %s388 = sand.u32 %s25, 1
        %s389 = scalar_lea.sflag [#allocation4], %s388
        %s390 = sand.u32 %s134, 1
        %s391 = smul.addr %s390, 128
        %s392 = scalar_lea.vmem [#allocation11], %s391
        %p393 = pneg %p147
        %p394 = pneg %p144
        %s395 = sand.u32 %s25, 1
        %s396 = scalar_lea.sflag [#allocation4], %s395
        %s397 = sand.u32 %s160, 1
        %s398 = smul.addr %s397, 4
        %s399 = scalar_lea.vmem [#allocation12], %s398
        %p400 = pneg %p173
        %p401 = pneg %p170
        %p402 = pneg %p201
        %p403 = pneg %p198
        %s404 = sand.u32 %s188, 1
        %s405 = scalar_lea.sflag [#allocation5], %s404
        %s406 = sand.u32 %s188, 1
        %s407 = smul.addr %s406, 64
        %s408 = scalar_lea.vmem [#allocation13], %s407
        %s409 = smul.u32 2, %s29
        %s410 = smul.u32 4, %s30
        %s411 = smul.u32 4, %s30
        %s412 = smul.u32 2, %s29
        %s413 = smul.u32 4, %s30
        %p415 = scmp.eq.s32.totalorder %s30, 0
        // Predicated region
        $region69: #{tpu_custom_call.1} parent=43 // pred_check
          %p416 = pneg %p415
        $region70: #{tpu_custom_call.1} parent=43 // pred_check_branch
          %418 = sbr.rel (%p416) target = $region72
        $region71: #{tpu_custom_call.1} parent=43 // pred_region
          %v419 = vld [vmem:[#allocation8] sm:$0xff]
          %v420 = vld [vmem:[%s334] sm:$0xf]
          %v421 = vld [vmem:[%s334 + $0x4] sm:$0xf]
          %v422 = vld [vmem:[#allocation6] sm:$0xf]
          %v423 = vld [vmem:[#allocation6 + $0x4] sm:$0xf]
          %v424 = vld [vmem:[#allocation6 + $0x8] sm:$0xf]
          %v425 = vld [vmem:[#allocation6 + $0xc] sm:$0xf]
          %v426 = vperm.slane %v419, 0
          %v429 = vunpack.c.l.b16 %v420
          %v430 = vunpack.c.l.b16 %v421
          %v431 = vpack.c.b16 %v430, %v429
          %v436 = vunpack.c.l.b16 %v422
          %v437 = vunpack.c.l.b16 %v423
          %v438 = vunpack.c.l.b16 %v424
          %v439 = vunpack.c.l.b16 %v425
          %v440 = vpack.c.b16 %v437, %v436
          %v441 = vpack.c.b16 %v439, %v438
          %vm444 = vcmask 261120
          %v446 = vsel %vm444, %v431, 0
          %448 = vmatpush.bf16.msra.mxu0 0
          %449 = vmatpush.bf16.msra.mxu0 0
          %450 = vmatpush.bf16.msra.mxu0 0
          %451 = vmatpush.bf16.msra.mxu0 0
          %452 = vmatpush.bf16.msra.mxu0 0
          %453 = vmatpush.bf16.msra.mxu0 0
          %454 = vmatpush.bf16.msra.mxu0 %v441
          %455 = vmatpush.bf16.msra.mxu0 %v440
          %456 = vmatmul.bf16.gmra.mxu0 %v446
          %v457 = vpop.f32.mrf.mxu0
          %v458 = vadd.f32 %v426, %v457
          %v459 = vpop.f32.mrf.mxu0
          %v460 = vadd.f32 %v426, %v459
          %461 = vdwg.mxu0
          %v462 = vmul.f32 %v458, 0.5
          %v463 = vmul.f32 %v460, 0.5
          %v464 = vmul.f32 %v458, 0.70710677
          %v465 = vmul.f32 %v460, 0.70710677
          %v466 = vmul.f32 %v464, %v464
          %v467 = vmin.f32 16.0, %v466
          %v468 = vmul.f32 %v467, 2.1237322e-06
          %v469 = vadd.f32 %v468, 0.00028619796
          %v470 = vmul.f32 %v467, %v469
          %v471 = vadd.f32 %v470, 0.0036580483
          %v472 = vmul.f32 %v467, %v471
          %v473 = vadd.f32 %v472, 0.05243302
          %v474 = vmul.f32 %v467, %v473
          %v475 = vadd.f32 %v474, 0.18741608
          %v476 = vmul.f32 %v467, %v475
          %v477 = vadd.f32 %v476, 1.1283791
          %v478 = vmul.f32 %v464, %v477
          %v479 = vmul.f32 %v467, 3.8918573e-05
          %v480 = vadd.f32 %v479, 0.001143296
          %v481 = vmul.f32 %v467, %v480
          %v482 = vadd.f32 %v481, 0.014752088
          %v483 = vmul.f32 %v467, %v482
          %v484 = vadd.f32 %v483, 0.112945676
          %v485 = vmul.f32 %v467, %v484
          %v486 = vadd.f32 %v485, 0.4994258
          %v487 = vmul.f32 %v467, %v486
          %v488 = vadd.f32 %v487, 1.0
          %v489 = vrcp.pop %v488
          %v490 = vmul.f32 %v488, %v489
          %v491 = vsub.f32 1.0, %v490
          %v492 = vmul.f32 %v489, %v491
          %v493 = vadd.f32 %v489, %v492
          %vm494 = vweird.f32 %v488
          %vm495 = vweird.f32 %v489
          %vm496 = vmor %vm494, %vm495
          %v497 = vsel %vm496, %v489, %v493
          %v498 = vand.u32 2147483647, %v488
          %vm499 = vcmp.eq.f32.partialorder %v498, 8.507059e+37
          %v500 = vand.u32 %v488, 2147483648
          %v501 = vor.u32 1.1754944e-38, %v500
          %v502 = vsel %vm499, %v501, %v497
          %v503 = vmul.f32 %v478, %v502
          %v504 = vmin.f32 %v503, 1.0
          %v505 = vmax.f32 %v504, -1.0
          %v506 = vmul.f32 %v465, %v465
          %v507 = vmin.f32 16.0, %v506
          %v508 = vmul.f32 %v507, 2.1237322e-06
          %v509 = vadd.f32 %v508, 0.00028619796
          %v510 = vmul.f32 %v507, %v509
          %v511 = vadd.f32 %v510, 0.0036580483
          %v512 = vmul.f32 %v507, %v511
          %v513 = vadd.f32 %v512, 0.05243302
          %v514 = vmul.f32 %v507, %v513
          %v515 = vadd.f32 %v514, 0.18741608
          %v516 = vmul.f32 %v507, %v515
          %v517 = vadd.f32 %v516, 1.1283791
          %v518 = vmul.f32 %v465, %v517
          %v519 = vmul.f32 %v507, 3.8918573e-05
          %v520 = vadd.f32 %v519, 0.001143296
          %v521 = vmul.f32 %v507, %v520
          %v522 = vadd.f32 %v521, 0.014752088
          %v523 = vmul.f32 %v507, %v522
          %v524 = vadd.f32 %v523, 0.112945676
          %v525 = vmul.f32 %v507, %v524
          %v526 = vadd.f32 %v525, 0.4994258
          %v527 = vmul.f32 %v507, %v526
          %v528 = vadd.f32 %v527, 1.0
          %v529 = vrcp.pop %v528
          %v530 = vmul.f32 %v528, %v529
          %v531 = vsub.f32 1.0, %v530
          %v532 = vmul.f32 %v529, %v531
          %v533 = vadd.f32 %v529, %v532
          %vm534 = vweird.f32 %v528
          %vm535 = vweird.f32 %v529
          %vm536 = vmor %vm534, %vm535
          %v537 = vsel %vm536, %v529, %v533
          %v538 = vand.u32 2147483647, %v528
          %vm539 = vcmp.eq.f32.partialorder %v538, 8.507059e+37
          %v540 = vand.u32 %v528, 2147483648
          %v541 = vor.u32 1.1754944e-38, %v540
          %v542 = vsel %vm539, %v541, %v537
          %v543 = vmul.f32 %v518, %v542
          %v544 = vmin.f32 %v543, 1.0
          %v545 = vmax.f32 %v544, -1.0
          %v546 = vadd.f32 %v505, 1.0
          %v547 = vadd.f32 %v545, 1.0
          %v548 = vmul.f32 %v462, %v546
          %v549 = vmul.f32 %v463, %v547
          %v550 = vsel %vm444, %v548, 0.0
          %551 = vadd.xlane.f32.xlu0 %v550
          %v552 = vpop.xlane.xlu0 %551
          %v553 = vsel %vm444, %v549, 0.0
          %554 = vadd.xlane.f32.xlu0 %v553
          %v555 = vpop.xlane.xlu0 %554
          %v556 = vrcp.pop 32.0
          %v557 = vmul.f32 32.0, %v556
          %v558 = vsub.f32 1.0, %v557
          %v559 = vmul.f32 %v556, %v558
          %v560 = vadd.f32 %v556, %v559
          %vm561 = vweird.f32 %v556
          %v562 = vsel %vm561, %v556, %v560
          %v563 = vmul.f32 %v552, %v562
          %v564 = vmul.f32 %v555, %v562
          %v565 = vsub.f32 %v548, %v563
          %v566 = vsub.f32 %v549, %v564
          %v567 = vmul.f32 %v565, %v565
          %v568 = vmul.f32 %v566, %v566
          %v569 = vsel %vm444, %v567, 0.0
          %570 = vadd.xlane.f32.xlu0 %v569
          %v571 = vpop.xlane.xlu0 %570
          %v572 = vsel %vm444, %v568, 0.0
          %573 = vadd.xlane.f32.xlu0 %v572
          %v574 = vpop.xlane.xlu0 %573
          %v575 = vmul.f32 %v571, %v562
          %v576 = vmul.f32 %v574, %v562
          %v577 = vadd.f32 %v575, 1e-12
          %v578 = vadd.f32 %v576, 1e-12
          %v579 = vrsqrt.pop %v577
          %v580 = vmul.f32 %v579, %v577
          %v581 = vmul.f32 %v580, %v579
          %v582 = vmul.f32 0.5, %v581
          %v583 = vsub.f32 1.5, %v582
          %v584 = vmul.f32 %v579, %v583
          %vm585 = vweird.f32 %v577
          %vm586 = vweird.f32 %v579
          %vm587 = vmor %vm585, %vm586
          %v588 = vsel %vm587, %v579, %v584
          %v589 = vrsqrt.pop %v578
          %v590 = vmul.f32 %v589, %v578
          %v591 = vmul.f32 %v590, %v589
          %v592 = vmul.f32 0.5, %v591
          %v593 = vsub.f32 1.5, %v592
          %v594 = vmul.f32 %v589, %v593
          %vm595 = vweird.f32 %v578
          %vm596 = vweird.f32 %v589
          %vm597 = vmor %vm595, %vm596
          %v598 = vsel %vm597, %v589, %v594
          %v599 = vmul.f32 %v565, %v588
          %v600 = vmul.f32 %v566, %v598
          %v601 = vperm.slane %v419, 1
          %v602 = vmul.f32 %v599, %v601
          %v603 = vmul.f32 %v600, %v601
          %v604 = vperm.slane %v419, 2
          %v605 = vadd.f32 %v602, %v604
          %v606 = vadd.f32 %v603, %v604
          %v607 = vpack.c.bf16 %v606, %v605
          %v608 = vld [vmem:[#allocation9] sm:$0xf]
          %v609 = vld [vmem:[#allocation9 + $0x4] sm:$0xf]
          %v610 = vld [vmem:[#allocation9 + $0x8] sm:$0xf]
          %v611 = vld [vmem:[#allocation9 + $0xc] sm:$0xf]
          %v616 = vunpack.c.l.b16 %v608
          %v617 = vunpack.c.l.b16 %v609
          %v618 = vunpack.c.l.b16 %v610
          %v619 = vunpack.c.l.b16 %v611
          %v620 = vpack.c.b16 %v617, %v616
          %v621 = vpack.c.b16 %v619, %v618
          %v625 = vsel %vm444, %v607, 0
          %627 = vmatpush.bf16.msra.mxu0 0
          %628 = vmatpush.bf16.msra.mxu0 0
          %629 = vmatpush.bf16.msra.mxu0 0
          %630 = vmatpush.bf16.msra.mxu0 0
          %631 = vmatpush.bf16.msra.mxu0 0
          %632 = vmatpush.bf16.msra.mxu0 0
          %633 = vmatpush.bf16.msra.mxu0 %v621
          %634 = vmatpush.bf16.msra.mxu0 %v620
          %635 = vmatmul.bf16.gmra.mxu0 %v625
          %v636 = vpop.f32.mrf.mxu0
          %v637 = vadd.f32 0.0, %v636
          %v638 = vpop.f32.mrf.mxu0
          %v639 = vadd.f32 0.0, %v638
          %640 = vdwg.mxu0
          %v641 = vpack.c.bf16 %v637, %v637
          %v642 = vpack.c.bf16 %v639, %v639
          %vm643 = vcmask 519168
          %644 = vst.msk [vmem:[#allocation2] sm:$0xf] %vm643, %v641
          %645 = vst.msk [vmem:[#allocation2 + $0x4] sm:$0xf] %vm643, %v642
        $region72: #{tpu_custom_call.1} parent=43 // pred_fallthru
          _
        %v646 = vld [vmem:[#allocation2] sm:$0xf]
        %v647 = vld [vmem:[#allocation2 + $0x4] sm:$0xf]
        %v648 = vld [vmem:[%s359] sm:$0xff]
        %v649 = vld [vmem:[%s359 + $0x8] sm:$0xff]
        %v650 = vld [vmem:[%s359 + $0x10] sm:$0xff]
        %v651 = vld [vmem:[%s359 + $0x18] sm:$0xff]
        %v652 = vld [vmem:[%s359 + $0x20] sm:$0xff]
        %v653 = vld [vmem:[%s359 + $0x28] sm:$0xff]
        %v654 = vld [vmem:[%s359 + $0x30] sm:$0xff]
        %v655 = vld [vmem:[%s359 + $0x38] sm:$0xff]
        %v656 = vld [vmem:[%s359 + $0x40] sm:$0xff]
        %v657 = vld [vmem:[%s359 + $0x48] sm:$0xff]
        %v658 = vld [vmem:[%s359 + $0x50] sm:$0xff]
        %v659 = vld [vmem:[%s359 + $0x58] sm:$0xff]
        %v660 = vld [vmem:[%s359 + $0x60] sm:$0xff]
        %v661 = vld [vmem:[%s359 + $0x68] sm:$0xff]
        %v662 = vld [vmem:[%s359 + $0x70] sm:$0xff]
        %v663 = vld [vmem:[%s359 + $0x78] sm:$0xff]
        %v664 = vld [vmem:[%s369] sm:$0xf]
        %v666 = vperm.slane %v664, 0
        %v667 = vperm.slane %v664, 1
        %v668 = vperm.slane %v664, 2
        %v669 = vperm.slane %v664, 3
        %v676 = vunpack.c.l.b16 %v646
        %v677 = vunpack.c.l.b16 %v647
        %v678 = vpack.c.b16 %v677, %v676
        %v695 = vunpack.c.l.b16 %v648
        %v696 = vunpack.c.h.b16 %v648
        %v697 = vunpack.c.l.b16 %v649
        %v698 = vunpack.c.h.b16 %v649
        %v699 = vunpack.c.l.b16 %v650
        %v700 = vunpack.c.h.b16 %v650
        %v701 = vunpack.c.l.b16 %v651
        %v702 = vunpack.c.h.b16 %v651
        %v703 = vunpack.c.l.b16 %v652
        %v704 = vunpack.c.h.b16 %v652
        %v705 = vunpack.c.l.b16 %v653
        %v706 = vunpack.c.h.b16 %v653
        %v707 = vunpack.c.l.b16 %v654
        %v708 = vunpack.c.h.b16 %v654
        %v709 = vunpack.c.l.b16 %v655
        %v710 = vunpack.c.h.b16 %v655
        %v711 = vunpack.c.l.b16 %v656
        %v712 = vunpack.c.h.b16 %v656
        %v713 = vunpack.c.l.b16 %v657
        %v714 = vunpack.c.h.b16 %v657
        %v715 = vunpack.c.l.b16 %v658
        %v716 = vunpack.c.h.b16 %v658
        %v717 = vunpack.c.l.b16 %v659
        %v718 = vunpack.c.h.b16 %v659
        %v719 = vunpack.c.l.b16 %v660
        %v720 = vunpack.c.h.b16 %v660
        %v721 = vunpack.c.l.b16 %v661
        %v722 = vunpack.c.h.b16 %v661
        %v723 = vunpack.c.l.b16 %v662
        %v724 = vunpack.c.h.b16 %v662
        %v725 = vunpack.c.l.b16 %v663
        %v726 = vunpack.c.h.b16 %v663
        %v727 = vpack.c.b16 %v699, %v695
        %v728 = vpack.c.b16 %v700, %v696
        %v729 = vpack.c.b16 %v701, %v697
        %v730 = vpack.c.b16 %v702, %v698
        %v731 = vpack.c.b16 %v707, %v703
        %v732 = vpack.c.b16 %v708, %v704
        %v733 = vpack.c.b16 %v709, %v705
        %v734 = vpack.c.b16 %v710, %v706
        %v735 = vpack.c.b16 %v715, %v711
        %v736 = vpack.c.b16 %v716, %v712
        %v737 = vpack.c.b16 %v717, %v713
        %v738 = vpack.c.b16 %v718, %v714
        %v739 = vpack.c.b16 %v723, %v719
        %v740 = vpack.c.b16 %v724, %v720
        %v741 = vpack.c.b16 %v725, %v721
        %v742 = vpack.c.b16 %v726, %v722
        %vm759 = vcmask 523264
        %v761 = vsel %vm759, %v678, 0
        %763 = vmatpush.bf16.msra.mxu0 0
        %764 = vmatpush.bf16.msra.mxu0 0
        %765 = vmatpush.bf16.msra.mxu0 0
        %766 = vmatpush.bf16.msra.mxu0 0
        %767 = vmatpush.bf16.msra.mxu0 %v739
        %768 = vmatpush.bf16.msra.mxu0 %v735
        %769 = vmatpush.bf16.msra.mxu0 %v731
        %770 = vmatpush.bf16.msra.mxu0 %v727
        %771 = vmatmul.bf16.gmra.mxu0 %v761
        %v772 = vpop.f32.mrf.mxu0
        %v773 = vadd.f32 %v666, %v772
        %v774 = vpop.f32.mrf.mxu0
        %v775 = vadd.f32 %v666, %v774
        %776 = vdwg.mxu0
        %777 = vmatpush.bf16.msra.mxu0 0
        %778 = vmatpush.bf16.msra.mxu0 0
        %779 = vmatpush.bf16.msra.mxu0 0
        %780 = vmatpush.bf16.msra.mxu0 0
        %781 = vmatpush.bf16.msra.mxu0 %v740
        %782 = vmatpush.bf16.msra.mxu0 %v736
        %783 = vmatpush.bf16.msra.mxu0 %v732
        %784 = vmatpush.bf16.msra.mxu0 %v728
        %785 = vmatmul.bf16.gmra.mxu0 %v761
        %v786 = vpop.f32.mrf.mxu0
        %v787 = vadd.f32 %v667, %v786
        %v788 = vpop.f32.mrf.mxu0
        %v789 = vadd.f32 %v667, %v788
        %790 = vdwg.mxu0
        %791 = vmatpush.bf16.msra.mxu0 0
        %792 = vmatpush.bf16.msra.mxu0 0
        %793 = vmatpush.bf16.msra.mxu0 0
        %794 = vmatpush.bf16.msra.mxu0 0
        %795 = vmatpush.bf16.msra.mxu0 %v741
        %796 = vmatpush.bf16.msra.mxu0 %v737
        %797 = vmatpush.bf16.msra.mxu0 %v733
        %798 = vmatpush.bf16.msra.mxu0 %v729
        %799 = vmatmul.bf16.gmra.mxu0 %v761
        %v800 = vpop.f32.mrf.mxu0
        %v801 = vadd.f32 %v668, %v800
        %v802 = vpop.f32.mrf.mxu0
        %v803 = vadd.f32 %v668, %v802
        %804 = vdwg.mxu0
        %805 = vmatpush.bf16.msra.mxu0 0
        %806 = vmatpush.bf16.msra.mxu0 0
        %807 = vmatpush.bf16.msra.mxu0 0
        %808 = vmatpush.bf16.msra.mxu0 0
        %809 = vmatpush.bf16.msra.mxu0 %v742
        %810 = vmatpush.bf16.msra.mxu0 %v738
        %811 = vmatpush.bf16.msra.mxu0 %v734
        %812 = vmatpush.bf16.msra.mxu0 %v730
        %813 = vmatmul.bf16.gmra.mxu0 %v761
        %v814 = vpop.f32.mrf.mxu0
        %v815 = vadd.f32 %v669, %v814
        %v816 = vpop.f32.mrf.mxu0
        %v817 = vadd.f32 %v669, %v816
        %818 = vdwg.mxu0
        %819 = vst [vmem:[%s408] sm:$0xff] %v773
        %820 = vst [vmem:[%s408 + $0x8] sm:$0xff] %v787
        %821 = vst [vmem:[%s408 + $0x10] sm:$0xff] %v801
        %822 = vst [vmem:[%s408 + $0x18] sm:$0xff] %v815
        %823 = vst [vmem:[%s408 + $0x20] sm:$0xff] %v775
        %824 = vst [vmem:[%s408 + $0x28] sm:$0xff] %v789
        %825 = vst [vmem:[%s408 + $0x30] sm:$0xff] %v803
        %826 = vst [vmem:[%s408 + $0x38] sm:$0xff] %v817
        %s827 = sand.u32 %s188, 1
        %s828 = scalar_lea.sflag [#allocation5], %s827
        %s829 = sand.u32 %s188, 1
        %s830 = smul.addr %s829, 64
        %s831 = scalar_lea.vmem [#allocation13], %s830
        // Predicated region
        $region73: #{tpu_custom_call.1} parent=43 // pred_check
          %p832 = pneg %p198
        $region74: #{tpu_custom_call.1} parent=43 // pred_check_branch
          %834 = sbr.rel (%p832) target = $region76
        $region75: #{tpu_custom_call.1} parent=43 // pred_region
          %s835 = smul.u32 2, %s29
          %s836 = smul.u32 4, %s30
          %838 = vsyncadd %s828, 0
          %s839 = smul.addr %s835, 8
          %s840 = sadd.s32 %s836, %s839
          %s841 = smul.addr %s840, 8
          %s842 = scalar_lea.hbm %s6, %s841
          %s843 = sshll.u32 %s831, 4
          %s844 = int_to_ptr.vmem [resolvable:$true] %s843
          %s845 = sshll.u32 %s842, 4
          %s846 = int_to_ptr.hbm [resolvable:$true] %s845
          %851 = dma.vmem_to_hbm [thread:$0]  %s844, 1024, %s846, %s828, 512, 1024, 32
        $region76: #{tpu_custom_call.1} parent=43 // pred_fallthru
          _
      $region44: #{tpu_custom_call.1} parent=5 // pred_fallthru
        _
      %p852 = scmp.le.s32.totalorder 2, %s20
      // Predicated region
      $region77: #{tpu_custom_call.1} parent=5 // pred_check
        %p853 = pneg %p852
      $region78: #{tpu_custom_call.1} parent=5 // pred_check_branch
        %855 = sbr.rel (%p853) target = $region80
      $region79: #{tpu_custom_call.1} parent=5 // pred_region
        %s856 = ssub.s32 %s20, 2
        // Predicated region
        $region81: #{tpu_custom_call.1} parent=79 // pred_check
          %p857 = pneg %p204
        $region82: #{tpu_custom_call.1} parent=79 // pred_check_branch
          %859 = sbr.rel (%p857) target = $region84
        $region83: #{tpu_custom_call.1} parent=79 // pred_region
          %s860 = sand.u32 %s189, 1
          %s861 = scalar_lea.sflag [#allocation5], %s860
          %s862 = sand.u32 %s189, 1
          %s863 = smul.addr %s862, 64
          %s864 = scalar_lea.vmem [#allocation13], %s863
          %866 = dma.done %s861, 1024
        $region84: #{tpu_custom_call.1} parent=79 // pred_fallthru
          _
      $region80: #{tpu_custom_call.1} parent=5 // pred_fallthru
        _
    $region6: #{tpu_custom_call.1} parent=1 // loop_footer
      %s24 = sadd.s32 1, %s20
    $region7: #{tpu_custom_call.1} parent=1 // loop_footer_branch
      %19 = sbr.rel target = $region3
    $region8: #{tpu_custom_call.1} parent=1 // loop_exit
      _
    %867 = vsyncpa [#allocation4], 1
    %s868 = scalar_lea.sflag [#allocation4], 1
    %869 = vsyncpa %s868, 1
    %870 = vsyncpa [#allocation7], 1
    %871 = vsyncpa [#allocation10], 1
    %872 = vsyncpa [#allocation5], 1
    %s873 = scalar_lea.sflag [#allocation5], 1
    %874 = vsyncpa %s873, 1

</llo_original>
